<compile_context>
chip_gen: v7x
topology: tpu7x:2x2x1
jax: 0.10.0
libtpu: 0.0.40
codegen_flags: <defaults>
</compile_context>

<pallas_src>
import jax
import jax.numpy as jnp
from jax import lax
from jax.experimental import pallas as pl
from jax.experimental.pallas import tpu as pltpu


def _round_up(x, m):
    return ((x + m - 1) // m) * m


def _vmem_capacity_bytes():
    try:
        return int(pltpu.get_tpu_info().vmem_capacity_bytes)
    except Exception:
        return 128 * 1024 * 1024  # assume v5e/v6e-class if the query is unavailable


def _make_kernel(n_head, d_k, d_v, *, seq_len, seq_pad, tq, with_attn,
                 compute_dtype, attn_dtype, eps=1e-6):
    scale = 1.0 / (d_k ** 0.5)
    cd = compute_dtype

    def body(x_ref, wq_ref, wk_ref, wv_ref, wo_ref,
             ln1_g_ref, ln1_b_ref, w1_ref, b1_ref, w2_ref, b2_ref,
             ln2_g_ref, ln2_b_ref, out_ref, attn_ref, k_scr, v_scr):
        qi = pl.program_id(1)

        # K/V projections: computed once per batch element (qi == 0) and cached in
        # VMEM scratch; the qi grid axis is "arbitrary" so this carry is valid.
        @pl.when(qi == 0)
        def _():
            xkv = x_ref[0].astype(cd)                                    # (L_pad, D)
            k_scr[...] = jnp.dot(xkv, wk_ref[...],
                                 preferred_element_type=jnp.float32).astype(cd)
            v_scr[...] = jnp.dot(xkv, wv_ref[...],
                                 preferred_element_type=jnp.float32).astype(cd)

        # Query rows for this tile, sliced out of the full-sequence block
        # (no duplicated / double-buffered xq input).
        row0 = pl.multiple_of(qi * tq, tq)
        xq = x_ref[0, pl.ds(row0, tq), :]                                # (tq, D) f32

        # Full-width Q projection (dense MXU lanes), pre-scaled by 1/sqrt(d_k).
        q_all = (jnp.dot(xq.astype(cd), wq_ref[...],
                         preferred_element_type=jnp.float32) * scale).astype(cd)

        k_all = k_scr[...]                                               # (L_pad, H*d_k)
        v_all = v_scr[...]                                               # (L_pad, H*d_v)

        if seq_pad > seq_len:
            key_valid = lax.broadcasted_iota(jnp.int32, (1, seq_pad), 1) < seq_len
        else:
            key_valid = None

        # TODO(synk): for n_head >= 16 switch this static unroll to
        #             lax.fori_loop(..., unroll=True) to bound vreg live ranges.
        ctxs = []
        for h in range(n_head):
            q_h = q_all[:, h * d_k:(h + 1) * d_k]                        # (tq, d_k)
            k_h = k_all[:, h * d_k:(h + 1) * d_k]                        # (L_pad, d_k)
            v_h = v_all[:, h * d_v:(h + 1) * d_v]                        # (L_pad, d_v)

            # QK^T without materializing a transpose (contract the last dims).
            s = lax.dot_general(q_h, k_h, (((1,), (1,)), ((), ())),
                                preferred_element_type=jnp.float32)      # (tq, L_pad)
            if key_valid is not None:
                s = jnp.where(key_valid, s, -jnp.inf)                    # mask pad keys
            s = s - jnp.max(s, axis=-1, keepdims=True)
            e = jnp.exp(s)
            denom = jnp.sum(e, axis=-1, keepdims=True)
            attn = e * pl.reciprocal(denom, approx=True)                 # EUP reciprocal

            if attn_ref is not None:
                attn_ref[0, h] = attn.astype(attn_dtype)

            ctxs.append(jnp.dot(attn.astype(cd), v_h,
                                preferred_element_type=jnp.float32))     # (tq, d_v)

        # Single fused output projection: (tq, H*d_v) @ (H*d_v, D), full MXU depth.
        ctx = jnp.concatenate(ctxs, axis=-1).astype(cd)
        o = jnp.dot(ctx, wo_ref[...], preferred_element_type=jnp.float32)

        # Residual + LayerNorm 1 (post-norm, biased variance), f32 VPU math.
        y = o + xq
        mu = jnp.mean(y, axis=-1, keepdims=True)
        var = jnp.mean((y - mu) ** 2, axis=-1, keepdims=True)
        y1 = (y - mu) * lax.rsqrt(var + eps) * ln1_g_ref[0] + ln1_b_ref[0]

        # Position-wise FFN + residual + LayerNorm 2 (dropout = identity, eval mode).
        # TODO(synk): for very large d_model/d_inner on v7x (64 MiB VMEM) split the FFN
        #             into a second pallas_call (or tile d_inner) instead of co-residing
        #             w1/w2 with the attention working set.
        h1 = jnp.dot(y1.astype(cd), w1_ref[...],
                     preferred_element_type=jnp.float32) + b1_ref[0]
        h1 = jnp.maximum(h1, 0.0)
        y2 = jnp.dot(h1.astype(cd), w2_ref[...],
                     preferred_element_type=jnp.float32) + b2_ref[0]
        z = y2 + y1
        mu2 = jnp.mean(z, axis=-1, keepdims=True)
        var2 = jnp.mean((z - mu2) ** 2, axis=-1, keepdims=True)
        out_ref[0] = (z - mu2) * lax.rsqrt(var2 + eps) * ln2_g_ref[0] + ln2_b_ref[0]

    if with_attn:
        return body

    def body_no_attn(*args):
        # args: 13 inputs, out_ref, k_scr, v_scr  ->  splice attn_ref=None.
        return body(*args[:14], None, *args[14:])

    return body_no_attn


def encoder_layer_pallas(x, params, *, n_head, d_k, d_v, return_attn=True,
                         q_tile=None, compute_dtype=jnp.bfloat16,
                         attn_dtype=jnp.float32, eps=1e-6):
    B, L, D = x.shape
    d_inner = params["w1"].shape[1]
    cd = compute_dtype

    # Per-generation budget: ~100 MiB on v5e/v6e (128 MiB phys), ~52 MiB on v7x (64 MiB).
    vmem_cap = _vmem_capacity_bytes()
    vmem_limit = min(int(vmem_cap * 0.82), 100 * 1024 * 1024)
    if q_tile is None:
        q_tile = 256 if vmem_cap >= 128 * 1024 * 1024 else 128

    # Pad the sequence so the query tile divides it; scores against padded key rows
    # are masked to -inf in-kernel, padded output rows are sliced off below.
    if L % q_tile == 0:
        L_pad, tq = L, q_tile
    elif L < q_tile:
        L_pad = _round_up(L, 8)
        tq = L_pad
    else:
        L_pad = _round_up(L, q_tile)
        tq = q_tile
    num_qt = L_pad // tq
    x_p = x if L_pad == L else jnp.pad(x, ((0, 0), (0, L_pad - L), (0, 0)))

    # MXU operands in compute_dtype (bf16 default: native MXU input, half the weight
    # DMA/VMEM); biases / LayerNorm params stay f32 for the elementwise path.
    def wcast(name):
        w = params[name]
        return w if w.dtype == cd else w.astype(cd)

    kernel = _make_kernel(n_head, d_k, d_v, seq_len=L, seq_pad=L_pad, tq=tq,
                          with_attn=return_attn, compute_dtype=cd,
                          attn_dtype=attn_dtype, eps=eps)

    def cspec(shape):
        # Constant index map: each weight block is DMA'd only once across the grid.
        # TODO(synk): mark these single-buffered (pipeline_mode=pl.Buffered(1)) to drop
        #             the unused second buffer once that path is validated.
        return pl.BlockSpec(shape, lambda b, qi: (0,) * len(shape))

    in_specs = [
        pl.BlockSpec((1, L_pad, D), lambda b, qi: (b, 0, 0)),  # x (full padded sequence)
        cspec((D, n_head * d_k)),                              # wq
        cspec((D, n_head * d_k)),                              # wk
        cspec((D, n_head * d_v)),                              # wv
        cspec((n_head * d_v, D)),                              # wo
        cspec((1, D)), cspec((1, D)),                          # ln1 gamma / beta
        cspec((D, d_inner)), cspec((1, d_inner)),              # w1, b1
        cspec((d_inner, D)), cspec((1, D)),                    # w2, b2
        cspec((1, D)), cspec((1, D)),                          # ln2 gamma / beta
    ]

    out_shape = [jax.ShapeDtypeStruct((B, L_pad, D), jnp.float32)]
    out_specs = [pl.BlockSpec((1, tq, D), lambda b, qi: (b, qi, 0))]
    if return_attn:
        out_shape.append(jax.ShapeDtypeStruct((B, n_head, L_pad, L_pad), attn_dtype))
        out_specs.append(pl.BlockSpec((1, n_head, tq, L_pad),
                                      lambda b, qi: (b, 0, qi, 0)))

    f = pl.pallas_call(
        kernel,
        out_shape=tuple(out_shape),
        grid_spec=pltpu.PrefetchScalarGridSpec(
            num_scalar_prefetch=0,
            grid=(B, num_qt),
            in_specs=in_specs,
            out_specs=tuple(out_specs),
            scratch_shapes=[pltpu.VMEM((L_pad, n_head * d_k), cd),   # cached K projection
                            pltpu.VMEM((L_pad, n_head * d_v), cd)],  # cached V projection
        ),
        compiler_params=pltpu.CompilerParams(
            # B "parallel" (megacore / v7x 2 TCs); qi "arbitrary" so the K/V cache is valid.
            dimension_semantics=("parallel", "arbitrary"),
            vmem_limit_bytes=vmem_limit,
        ),
    )
    # TODO(synk): for L >= ~4096 at large D, stream K/V in tiles (flash-style online
    #             softmax) instead of holding the full (L, D) block in VMEM on v7x.

    outs = f(x_p,
             wcast("wq"), wcast("wk"), wcast("wv"), wcast("wo"),
             params["ln1_g"], params["ln1_b"],
             wcast("w1"), params["b1"], wcast("w2"), params["b2"],
             params["ln2_g"], params["ln2_b"])

    enc_out = outs[0]
    if L_pad != L:
        enc_out = enc_out[:, :L, :]
    if return_attn:
        enc_attn = outs[1]
        if L_pad != L:
            enc_attn = enc_attn[:, :, :L, :L]
        return enc_out, enc_attn
    return enc_out, None


def encoder_layer_ref(x, params, *, n_head, d_k, d_v, eps=1e-6):
    """Pure-JAX reference mirroring the PyTorch forward (eval mode, mask=None)."""
    B, L, D = x.shape
    q = (x @ params["wq"]).reshape(B, L, n_head, d_k).transpose(0, 2, 1, 3)
    k = (x @ params["wk"]).reshape(B, L, n_head, d_k).transpose(0, 2, 1, 3)
    v = (x @ params["wv"]).reshape(B, L, n_head, d_v).transpose(0, 2, 1, 3)
    s = jnp.einsum("bhqd,bhkd->bhqk", q, k) / (d_k ** 0.5)
    attn = jax.nn.softmax(s, axis=-1)
    o = jnp.einsum("bhqk,bhkd->bhqd", attn, v).transpose(0, 2, 1, 3).reshape(B, L, -1)
    o = o @ params["wo"]
    y = o + x
    mu = y.mean(-1, keepdims=True); var = ((y - mu) ** 2).mean(-1, keepdims=True)
    y1 = (y - mu) / jnp.sqrt(var + eps) * params["ln1_g"][0] + params["ln1_b"][0]
    h1 = jax.nn.relu(y1 @ params["w1"] + params["b1"][0])
    y2 = h1 @ params["w2"] + params["b2"][0]
    z = y2 + y1
    mu2 = z.mean(-1, keepdims=True); var2 = ((z - mu2) ** 2).mean(-1, keepdims=True)
    out = (z - mu2) / jnp.sqrt(var2 + eps) * params["ln2_g"][0] + params["ln2_b"][0]
    return out, attn


if __name__ == "__main__":
    # Small shapes consistent with the module: d_model = n_head * d_k
    B, L = 2, 8
    d_model, d_inner, n_head = 32, 64, 4
    d_k = d_v = d_model // n_head

    key = jax.random.PRNGKey(0)
    ks = jax.random.split(key, 12)

    def init(k, shape, scale=0.1):
        return (scale * jax.random.normal(k, shape)).astype(jnp.float32)

    params = {
        "wq": init(ks[0], (d_model, n_head * d_k)),
        "wk": init(ks[1], (d_model, n_head * d_k)),
        "wv": init(ks[2], (d_model, n_head * d_v)),
        "wo": init(ks[3], (n_head * d_v, d_model)),
        "ln1_g": jnp.ones((1, d_model), jnp.float32),
        "ln1_b": jnp.zeros((1, d_model), jnp.float32),
        "w1": init(ks[4], (d_model, d_inner)),
        "b1": init(ks[5], (1, d_inner)),
        "w2": init(ks[6], (d_inner, d_model)),
        "b2": init(ks[7], (1, d_model)),
        "ln2_g": jnp.ones((1, d_model), jnp.float32),
        "ln2_b": jnp.zeros((1, d_model), jnp.float32),
    }

    x = jax.random.normal(ks[8], (B, L, d_model), dtype=jnp.float32)
    ref_out, ref_attn = encoder_layer_ref(x, params, n_head=n_head, d_k=d_k, d_v=d_v)

    # 1) Default fast path: bf16 MXU operands / weights, f32 accumulation + elementwise.
    out_bf, attn_bf = encoder_layer_pallas(x, params, n_head=n_head, d_k=d_k, d_v=d_v)
    jax.block_until_ready(out_bf)
    jax.block_until_ready(attn_bf)
    assert out_bf.shape == (B, L, d_model)
    assert attn_bf.shape == (B, n_head, L, L)
    assert jnp.allclose(out_bf, ref_out, atol=5e-2, rtol=5e-2)
    assert jnp.allclose(attn_bf, ref_attn, atol=2e-2, rtol=2e-2)

    # 2) f32 MXU path (approx-reciprocal softmax): tighter check against the reference.
    out_f32, attn_f32 = encoder_layer_pallas(x, params, n_head=n_head, d_k=d_k, d_v=d_v,
                                             compute_dtype=jnp.float32)
    jax.block_until_ready(out_f32)
    assert jnp.allclose(out_f32, ref_out, atol=2e-3, rtol=2e-3)
    assert jnp.allclose(attn_f32, ref_attn, atol=1e-3, rtol=1e-3)

    # 3) No-attn-writeback path + sequence length that exercises padding / key masking.
    L2 = 12
    x2 = jax.random.normal(ks[9], (B, L2, d_model), dtype=jnp.float32)
    ref_out2, _ = encoder_layer_ref(x2, params, n_head=n_head, d_k=d_k, d_v=d_v)
    out2, attn2 = encoder_layer_pallas(x2, params, n_head=n_head, d_k=d_k, d_v=d_v,
                                       return_attn=False, compute_dtype=jnp.float32)
    jax.block_until_ready(out2)
    assert attn2 is None
    assert out2.shape == (B, L2, d_model)
    assert jnp.allclose(out2, ref_out2, atol=2e-3, rtol=2e-3)

    print("KERNEL_OK")
</pallas_src>

<mosaic_0001>
module attributes {stable_mosaic.version = 11 : i64} {
  func.func @body(%arg0: i32, %arg1: i32, %arg2: memref<1x8x32xf32, #tpu.memory_space<vmem>>, %arg3: memref<32x32xbf16, #tpu.memory_space<vmem>>, %arg4: memref<32x32xbf16, #tpu.memory_space<vmem>>, %arg5: memref<32x32xbf16, #tpu.memory_space<vmem>>, %arg6: memref<32x32xbf16, #tpu.memory_space<vmem>>, %arg7: memref<1x32xf32, #tpu.memory_space<vmem>>, %arg8: memref<1x32xf32, #tpu.memory_space<vmem>>, %arg9: memref<32x64xbf16, #tpu.memory_space<vmem>>, %arg10: memref<1x64xf32, #tpu.memory_space<vmem>>, %arg11: memref<64x32xbf16, #tpu.memory_space<vmem>>, %arg12: memref<1x32xf32, #tpu.memory_space<vmem>>, %arg13: memref<1x32xf32, #tpu.memory_space<vmem>>, %arg14: memref<1x32xf32, #tpu.memory_space<vmem>>, %arg15: memref<1x8x32xf32, #tpu.memory_space<vmem>>, %arg16: memref<1x4x8x8xf32, #tpu.memory_space<vmem>>, %arg17: memref<8x32xbf16, #tpu.memory_space<vmem>>, %arg18: memref<8x32xbf16, #tpu.memory_space<vmem>>) attributes {dimension_semantics = [#tpu.dimension_semantics<parallel>, #tpu.dimension_semantics<arbitrary>], iteration_bounds = array<i64: 2, 1>, scalar_prefetch = 0 : i64, scratch_operands = 2 : i64, tpu.core_type = #tpu.core_type<tc>, window_params = [{transform_indices = @transform_0, window_bounds = array<i64: 1, 8, 32>}, {pipeline_mode = #tpu.pipeline_mode<synchronous>, transform_indices = @transform_1, window_bounds = array<i64: 32, 32>}, {pipeline_mode = #tpu.pipeline_mode<synchronous>, transform_indices = @transform_2, window_bounds = array<i64: 32, 32>}, {pipeline_mode = #tpu.pipeline_mode<synchronous>, transform_indices = @transform_3, window_bounds = array<i64: 32, 32>}, {pipeline_mode = #tpu.pipeline_mode<synchronous>, transform_indices = @transform_4, window_bounds = array<i64: 32, 32>}, {pipeline_mode = #tpu.pipeline_mode<synchronous>, transform_indices = @transform_5, window_bounds = array<i64: 1, 32>}, {pipeline_mode = #tpu.pipeline_mode<synchronous>, transform_indices = @transform_6, window_bounds = array<i64: 1, 32>}, {pipeline_mode = #tpu.pipeline_mode<synchronous>, transform_indices = @transform_7, window_bounds = array<i64: 32, 64>}, {pipeline_mode = #tpu.pipeline_mode<synchronous>, transform_indices = @transform_8, window_bounds = array<i64: 1, 64>}, {pipeline_mode = #tpu.pipeline_mode<synchronous>, transform_indices = @transform_9, window_bounds = array<i64: 64, 32>}, {pipeline_mode = #tpu.pipeline_mode<synchronous>, transform_indices = @transform_10, window_bounds = array<i64: 1, 32>}, {pipeline_mode = #tpu.pipeline_mode<synchronous>, transform_indices = @transform_11, window_bounds = array<i64: 1, 32>}, {pipeline_mode = #tpu.pipeline_mode<synchronous>, transform_indices = @transform_12, window_bounds = array<i64: 1, 32>}, {transform_indices = @transform_13, window_bounds = array<i64: 1, 8, 32>}, {transform_indices = @transform_14, window_bounds = array<i64: 1, 4, 8, 8>}]} {
    %c0_i32 = arith.constant 0 : i32
    %0 = arith.cmpi eq, %arg1, %c0_i32 : i32
    %1 = arith.extui %0 : i1 to i32
    %c0_i32_0 = arith.constant 0 : i32
    %2 = arith.cmpi ne, %1, %c0_i32_0 : i32
    scf.if %2 {
      %c0_73 = arith.constant 0 : index
      %c0_74 = arith.constant 0 : index
      %c0_75 = arith.constant 0 : index
      %175 = vector.load %arg2[%c0_73, %c0_74, %c0_75] : memref<1x8x32xf32, #tpu.memory_space<vmem>>, vector<1x8x32xf32>
      %176 = vector.shape_cast %175 : vector<1x8x32xf32> to vector<8x32xf32>
      %177 = arith.truncf %176 : vector<8x32xf32> to vector<8x32xbf16>
      %c0_76 = arith.constant 0 : index
      %c0_77 = arith.constant 0 : index
      %178 = vector.load %arg4[%c0_76, %c0_77] : memref<32x32xbf16, #tpu.memory_space<vmem>>, vector<32x32xbf16>
      %cst_78 = arith.constant dense<0.000000e+00> : vector<8x32xf32>
      %179 = tpu.matmul %177, %178, %cst_78 {dimension_numbers = #tpu.dot_dimension_numbers<[1], [0], [0], [1], [0, 0, 1, 1], [], []>} : vector<8x32xbf16>, vector<32x32xbf16>, vector<8x32xf32> -> vector<8x32xf32>
      %180 = arith.truncf %179 : vector<8x32xf32> to vector<8x32xbf16>
      %c0_79 = arith.constant 0 : index
      %c0_80 = arith.constant 0 : index
      %181 = vector.load %arg17[%c0_79, %c0_80] : memref<8x32xbf16, #tpu.memory_space<vmem>>, vector<8x32xbf16>
      tpu.vector_store %arg17[%c0_79, %c0_80], %180 {strides = array<i32>} : memref<8x32xbf16, #tpu.memory_space<vmem>>, vector<8x32xbf16>,
      %c0_81 = arith.constant 0 : index
      %c0_82 = arith.constant 0 : index
      %182 = vector.load %arg5[%c0_81, %c0_82] : memref<32x32xbf16, #tpu.memory_space<vmem>>, vector<32x32xbf16>
      %cst_83 = arith.constant dense<0.000000e+00> : vector<8x32xf32>
      %183 = tpu.matmul %177, %182, %cst_83 {dimension_numbers = #tpu.dot_dimension_numbers<[1], [0], [0], [1], [0, 0, 1, 1], [], []>} : vector<8x32xbf16>, vector<32x32xbf16>, vector<8x32xf32> -> vector<8x32xf32>
      %184 = arith.truncf %183 : vector<8x32xf32> to vector<8x32xbf16>
      %c0_84 = arith.constant 0 : index
      %c0_85 = arith.constant 0 : index
      %185 = vector.load %arg18[%c0_84, %c0_85] : memref<8x32xbf16, #tpu.memory_space<vmem>>, vector<8x32xbf16>
      tpu.vector_store %arg18[%c0_84, %c0_85], %184 {strides = array<i32>} : memref<8x32xbf16, #tpu.memory_space<vmem>>, vector<8x32xbf16>,
    } else {
    }
    %c8_i32 = arith.constant 8 : i32
    %3 = arith.muli %arg1, %c8_i32 : i32
    %4 = tpu.assume_multiple %3, 8 : i32
    %c0 = arith.constant 0 : index
    %5 = arith.index_cast %4 : i32 to index
    %c0_1 = arith.constant 0 : index
    %6 = vector.load %arg2[%c0, %5, %c0_1] : memref<1x8x32xf32, #tpu.memory_space<vmem>>, vector<1x8x32xf32>
    %7 = vector.shape_cast %6 : vector<1x8x32xf32> to vector<8x32xf32>
    %8 = arith.truncf %7 : vector<8x32xf32> to vector<8x32xbf16>
    %c0_2 = arith.constant 0 : index
    %c0_3 = arith.constant 0 : index
    %9 = vector.load %arg3[%c0_2, %c0_3] : memref<32x32xbf16, #tpu.memory_space<vmem>>, vector<32x32xbf16>
    %cst = arith.constant dense<0.000000e+00> : vector<8x32xf32>
    %10 = tpu.matmul %8, %9, %cst {dimension_numbers = #tpu.dot_dimension_numbers<[1], [0], [0], [1], [0, 0, 1, 1], [], []>} : vector<8x32xbf16>, vector<32x32xbf16>, vector<8x32xf32> -> vector<8x32xf32>
    %cst_4 = arith.constant 0.353553385 : f32
    %11 = vector.broadcast %cst_4 : f32 to vector<8x32xf32>
    %12 = arith.mulf %10, %11 : vector<8x32xf32>
    %13 = arith.truncf %12 : vector<8x32xf32> to vector<8x32xbf16>
    %c0_5 = arith.constant 0 : index
    %c0_6 = arith.constant 0 : index
    %14 = vector.load %arg17[%c0_5, %c0_6] : memref<8x32xbf16, #tpu.memory_space<vmem>>, vector<8x32xbf16>
    %c0_7 = arith.constant 0 : index
    %c0_8 = arith.constant 0 : index
    %15 = vector.load %arg18[%c0_7, %c0_8] : memref<8x32xbf16, #tpu.memory_space<vmem>>, vector<8x32xbf16>
    %16 = vector.extract_strided_slice %13 {offsets = [0, 0], sizes = [8, 8], strides = [1, 1]} : vector<8x32xbf16> to vector<8x8xbf16>
    %17 = vector.extract_strided_slice %14 {offsets = [0, 0], sizes = [8, 8], strides = [1, 1]} : vector<8x32xbf16> to vector<8x8xbf16>
    %18 = vector.extract_strided_slice %15 {offsets = [0, 0], sizes = [8, 8], strides = [1, 1]} : vector<8x32xbf16> to vector<8x8xbf16>
    %cst_9 = arith.constant dense<0.000000e+00> : vector<8x8xf32>
    %19 = tpu.matmul %16, %17, %cst_9 {dimension_numbers = #tpu.dot_dimension_numbers<[1], [1], [0], [0], [0, 0, 1, 0], [], []>} : vector<8x8xbf16>, vector<8x8xbf16>, vector<8x8xf32> -> vector<8x8xf32>
    %cst_10 = arith.constant dense<0xFF800000> : vector<8xf32>
    %20 = vector.multi_reduction <maximumf>, %19, %cst_10 [1] : vector<8x8xf32> to vector<8xf32>
    %21 = vector.shape_cast %20 : vector<8xf32> to vector<8x1xf32>
    %22 = vector.broadcast %21 : vector<8x1xf32> to vector<8x8xf32>
    %23 = arith.subf %19, %22 : vector<8x8xf32>
    %24 = math.exp %23 : vector<8x8xf32>
    %cst_11 = arith.constant dense<0.000000e+00> : vector<8xf32>
    %25 = vector.multi_reduction <add>, %24, %cst_11 [1] : vector<8x8xf32> to vector<8xf32>
    %26 = vector.shape_cast %25 : vector<8xf32> to vector<8x1xf32>
    %27 = tpu.reciprocal %26 {approx = true} : vector<8x1xf32> -> vector<8x1xf32>
    %28 = vector.broadcast %27 : vector<8x1xf32> to vector<8x8xf32>
    %29 = arith.mulf %24, %28 : vector<8x8xf32>
    %c0_12 = arith.constant 0 : index
    %c0_13 = arith.constant 0 : index
    %c0_14 = arith.constant 0 : index
    %c0_15 = arith.constant 0 : index
    %30 = vector.load %arg16[%c0_12, %c0_13, %c0_14, %c0_15] : memref<1x4x8x8xf32, #tpu.memory_space<vmem>>, vector<1x1x8x8xf32>
    %31 = vector.shape_cast %30 : vector<1x1x8x8xf32> to vector<8x8xf32>
    %32 = vector.shape_cast %29 : vector<8x8xf32> to vector<1x1x8x8xf32>
    tpu.vector_store %arg16[%c0_12, %c0_13, %c0_14, %c0_15], %32 {strides = array<i32>} : memref<1x4x8x8xf32, #tpu.memory_space<vmem>>, vector<1x1x8x8xf32>,
    %33 = arith.truncf %29 : vector<8x8xf32> to vector<8x8xbf16>
    %cst_16 = arith.constant dense<0.000000e+00> : vector<8x8xf32>
    %34 = tpu.matmul %33, %18, %cst_16 {dimension_numbers = #tpu.dot_dimension_numbers<[1], [0], [0], [1], [0, 0, 1, 1], [], []>} : vector<8x8xbf16>, vector<8x8xbf16>, vector<8x8xf32> -> vector<8x8xf32>
    %35 = vector.extract_strided_slice %13 {offsets = [0, 8], sizes = [8, 8], strides = [1, 1]} : vector<8x32xbf16> to vector<8x8xbf16>
    %36 = vector.extract_strided_slice %14 {offsets = [0, 8], sizes = [8, 8], strides = [1, 1]} : vector<8x32xbf16> to vector<8x8xbf16>
    %37 = vector.extract_strided_slice %15 {offsets = [0, 8], sizes = [8, 8], strides = [1, 1]} : vector<8x32xbf16> to vector<8x8xbf16>
    %cst_17 = arith.constant dense<0.000000e+00> : vector<8x8xf32>
    %38 = tpu.matmul %35, %36, %cst_17 {dimension_numbers = #tpu.dot_dimension_numbers<[1], [1], [0], [0], [0, 0, 1, 0], [], []>} : vector<8x8xbf16>, vector<8x8xbf16>, vector<8x8xf32> -> vector<8x8xf32>
    %cst_18 = arith.constant dense<0xFF800000> : vector<8xf32>
    %39 = vector.multi_reduction <maximumf>, %38, %cst_18 [1] : vector<8x8xf32> to vector<8xf32>
    %40 = vector.shape_cast %39 : vector<8xf32> to vector<8x1xf32>
    %41 = vector.broadcast %40 : vector<8x1xf32> to vector<8x8xf32>
    %42 = arith.subf %38, %41 : vector<8x8xf32>
    %43 = math.exp %42 : vector<8x8xf32>
    %cst_19 = arith.constant dense<0.000000e+00> : vector<8xf32>
    %44 = vector.multi_reduction <add>, %43, %cst_19 [1] : vector<8x8xf32> to vector<8xf32>
    %45 = vector.shape_cast %44 : vector<8xf32> to vector<8x1xf32>
    %46 = tpu.reciprocal %45 {approx = true} : vector<8x1xf32> -> vector<8x1xf32>
    %47 = vector.broadcast %46 : vector<8x1xf32> to vector<8x8xf32>
    %48 = arith.mulf %43, %47 : vector<8x8xf32>
    %c0_20 = arith.constant 0 : index
    %c1 = arith.constant 1 : index
    %c0_21 = arith.constant 0 : index
    %c0_22 = arith.constant 0 : index
    %49 = vector.load %arg16[%c0_20, %c1, %c0_21, %c0_22] : memref<1x4x8x8xf32, #tpu.memory_space<vmem>>, vector<1x1x8x8xf32>
    %50 = vector.shape_cast %49 : vector<1x1x8x8xf32> to vector<8x8xf32>
    %51 = vector.shape_cast %48 : vector<8x8xf32> to vector<1x1x8x8xf32>
    tpu.vector_store %arg16[%c0_20, %c1, %c0_21, %c0_22], %51 {strides = array<i32>} : memref<1x4x8x8xf32, #tpu.memory_space<vmem>>, vector<1x1x8x8xf32>,
    %52 = arith.truncf %48 : vector<8x8xf32> to vector<8x8xbf16>
    %cst_23 = arith.constant dense<0.000000e+00> : vector<8x8xf32>
    %53 = tpu.matmul %52, %37, %cst_23 {dimension_numbers = #tpu.dot_dimension_numbers<[1], [0], [0], [1], [0, 0, 1, 1], [], []>} : vector<8x8xbf16>, vector<8x8xbf16>, vector<8x8xf32> -> vector<8x8xf32>
    %54 = vector.extract_strided_slice %13 {offsets = [0, 16], sizes = [8, 8], strides = [1, 1]} : vector<8x32xbf16> to vector<8x8xbf16>
    %55 = vector.extract_strided_slice %14 {offsets = [0, 16], sizes = [8, 8], strides = [1, 1]} : vector<8x32xbf16> to vector<8x8xbf16>
    %56 = vector.extract_strided_slice %15 {offsets = [0, 16], sizes = [8, 8], strides = [1, 1]} : vector<8x32xbf16> to vector<8x8xbf16>
    %cst_24 = arith.constant dense<0.000000e+00> : vector<8x8xf32>
    %57 = tpu.matmul %54, %55, %cst_24 {dimension_numbers = #tpu.dot_dimension_numbers<[1], [1], [0], [0], [0, 0, 1, 0], [], []>} : vector<8x8xbf16>, vector<8x8xbf16>, vector<8x8xf32> -> vector<8x8xf32>
    %cst_25 = arith.constant dense<0xFF800000> : vector<8xf32>
    %58 = vector.multi_reduction <maximumf>, %57, %cst_25 [1] : vector<8x8xf32> to vector<8xf32>
    %59 = vector.shape_cast %58 : vector<8xf32> to vector<8x1xf32>
    %60 = vector.broadcast %59 : vector<8x1xf32> to vector<8x8xf32>
    %61 = arith.subf %57, %60 : vector<8x8xf32>
    %62 = math.exp %61 : vector<8x8xf32>
    %cst_26 = arith.constant dense<0.000000e+00> : vector<8xf32>
    %63 = vector.multi_reduction <add>, %62, %cst_26 [1] : vector<8x8xf32> to vector<8xf32>
    %64 = vector.shape_cast %63 : vector<8xf32> to vector<8x1xf32>
    %65 = tpu.reciprocal %64 {approx = true} : vector<8x1xf32> -> vector<8x1xf32>
    %66 = vector.broadcast %65 : vector<8x1xf32> to vector<8x8xf32>
    %67 = arith.mulf %62, %66 : vector<8x8xf32>
    %c0_27 = arith.constant 0 : index
    %c2 = arith.constant 2 : index
    %c0_28 = arith.constant 0 : index
    %c0_29 = arith.constant 0 : index
    %68 = vector.load %arg16[%c0_27, %c2, %c0_28, %c0_29] : memref<1x4x8x8xf32, #tpu.memory_space<vmem>>, vector<1x1x8x8xf32>
    %69 = vector.shape_cast %68 : vector<1x1x8x8xf32> to vector<8x8xf32>
    %70 = vector.shape_cast %67 : vector<8x8xf32> to vector<1x1x8x8xf32>
    tpu.vector_store %arg16[%c0_27, %c2, %c0_28, %c0_29], %70 {strides = array<i32>} : memref<1x4x8x8xf32, #tpu.memory_space<vmem>>, vector<1x1x8x8xf32>,
    %71 = arith.truncf %67 : vector<8x8xf32> to vector<8x8xbf16>
    %cst_30 = arith.constant dense<0.000000e+00> : vector<8x8xf32>
    %72 = tpu.matmul %71, %56, %cst_30 {dimension_numbers = #tpu.dot_dimension_numbers<[1], [0], [0], [1], [0, 0, 1, 1], [], []>} : vector<8x8xbf16>, vector<8x8xbf16>, vector<8x8xf32> -> vector<8x8xf32>
    %73 = vector.extract_strided_slice %13 {offsets = [0, 24], sizes = [8, 8], strides = [1, 1]} : vector<8x32xbf16> to vector<8x8xbf16>
    %74 = vector.extract_strided_slice %14 {offsets = [0, 24], sizes = [8, 8], strides = [1, 1]} : vector<8x32xbf16> to vector<8x8xbf16>
    %75 = vector.extract_strided_slice %15 {offsets = [0, 24], sizes = [8, 8], strides = [1, 1]} : vector<8x32xbf16> to vector<8x8xbf16>
    %cst_31 = arith.constant dense<0.000000e+00> : vector<8x8xf32>
    %76 = tpu.matmul %73, %74, %cst_31 {dimension_numbers = #tpu.dot_dimension_numbers<[1], [1], [0], [0], [0, 0, 1, 0], [], []>} : vector<8x8xbf16>, vector<8x8xbf16>, vector<8x8xf32> -> vector<8x8xf32>
    %cst_32 = arith.constant dense<0xFF800000> : vector<8xf32>
    %77 = vector.multi_reduction <maximumf>, %76, %cst_32 [1] : vector<8x8xf32> to vector<8xf32>
    %78 = vector.shape_cast %77 : vector<8xf32> to vector<8x1xf32>
    %79 = vector.broadcast %78 : vector<8x1xf32> to vector<8x8xf32>
    %80 = arith.subf %76, %79 : vector<8x8xf32>
    %81 = math.exp %80 : vector<8x8xf32>
    %cst_33 = arith.constant dense<0.000000e+00> : vector<8xf32>
    %82 = vector.multi_reduction <add>, %81, %cst_33 [1] : vector<8x8xf32> to vector<8xf32>
    %83 = vector.shape_cast %82 : vector<8xf32> to vector<8x1xf32>
    %84 = tpu.reciprocal %83 {approx = true} : vector<8x1xf32> -> vector<8x1xf32>
    %85 = vector.broadcast %84 : vector<8x1xf32> to vector<8x8xf32>
    %86 = arith.mulf %81, %85 : vector<8x8xf32>
    %c0_34 = arith.constant 0 : index
    %c3 = arith.constant 3 : index
    %c0_35 = arith.constant 0 : index
    %c0_36 = arith.constant 0 : index
    %87 = vector.load %arg16[%c0_34, %c3, %c0_35, %c0_36] : memref<1x4x8x8xf32, #tpu.memory_space<vmem>>, vector<1x1x8x8xf32>
    %88 = vector.shape_cast %87 : vector<1x1x8x8xf32> to vector<8x8xf32>
    %89 = vector.shape_cast %86 : vector<8x8xf32> to vector<1x1x8x8xf32>
    tpu.vector_store %arg16[%c0_34, %c3, %c0_35, %c0_36], %89 {strides = array<i32>} : memref<1x4x8x8xf32, #tpu.memory_space<vmem>>, vector<1x1x8x8xf32>,
    %90 = arith.truncf %86 : vector<8x8xf32> to vector<8x8xbf16>
    %cst_37 = arith.constant dense<0.000000e+00> : vector<8x8xf32>
    %91 = tpu.matmul %90, %75, %cst_37 {dimension_numbers = #tpu.dot_dimension_numbers<[1], [0], [0], [1], [0, 0, 1, 1], [], []>} : vector<8x8xbf16>, vector<8x8xbf16>, vector<8x8xf32> -> vector<8x8xf32>
    %92 = tpu.concatenate %34, %53, %72, %91 in 1 : vector<8x8xf32>, vector<8x8xf32>, vector<8x8xf32>, vector<8x8xf32> -> vector<8x32xf32>
    %93 = arith.truncf %92 : vector<8x32xf32> to vector<8x32xbf16>
    %c0_38 = arith.constant 0 : index
    %c0_39 = arith.constant 0 : index
    %94 = vector.load %arg6[%c0_38, %c0_39] : memref<32x32xbf16, #tpu.memory_space<vmem>>, vector<32x32xbf16>
    %cst_40 = arith.constant dense<0.000000e+00> : vector<8x32xf32>
    %95 = tpu.matmul %93, %94, %cst_40 {dimension_numbers = #tpu.dot_dimension_numbers<[1], [0], [0], [1], [0, 0, 1, 1], [], []>} : vector<8x32xbf16>, vector<32x32xbf16>, vector<8x32xf32> -> vector<8x32xf32>
    %96 = arith.addf %95, %7 : vector<8x32xf32>
    %cst_41 = arith.constant dense<0.000000e+00> : vector<8xf32>
    %97 = vector.multi_reduction <add>, %96, %cst_41 [1] : vector<8x32xf32> to vector<8xf32>
    %98 = vector.shape_cast %97 : vector<8xf32> to vector<8x1xf32>
    %cst_42 = arith.constant 3.200000e+01 : f32
    %99 = vector.broadcast %cst_42 : f32 to vector<8x1xf32>
    %100 = arith.divf %98, %99 : vector<8x1xf32>
    %101 = vector.broadcast %100 : vector<8x1xf32> to vector<8x32xf32>
    %102 = arith.subf %96, %101 : vector<8x32xf32>
    %103 = arith.mulf %102, %102 : vector<8x32xf32>
    %cst_43 = arith.constant dense<0.000000e+00> : vector<8xf32>
    %104 = vector.multi_reduction <add>, %103, %cst_43 [1] : vector<8x32xf32> to vector<8xf32>
    %105 = vector.shape_cast %104 : vector<8xf32> to vector<8x1xf32>
    %cst_44 = arith.constant 3.200000e+01 : f32
    %106 = vector.broadcast %cst_44 : f32 to vector<8x1xf32>
    %107 = arith.divf %105, %106 : vector<8x1xf32>
    %108 = vector.broadcast %100 : vector<8x1xf32> to vector<8x32xf32>
    %109 = arith.subf %96, %108 : vector<8x32xf32>
    %cst_45 = arith.constant 9.99999997E-7 : f32
    %110 = vector.broadcast %cst_45 : f32 to vector<8x1xf32>
    %111 = arith.addf %107, %110 : vector<8x1xf32>
    %112 = math.rsqrt %111 : vector<8x1xf32>
    %113 = vector.broadcast %112 : vector<8x1xf32> to vector<8x32xf32>
    %114 = arith.mulf %109, %113 : vector<8x32xf32>
    %c0_46 = arith.constant 0 : index
    %c0_47 = arith.constant 0 : index
    %115 = vector.load %arg7[%c0_46, %c0_47] : memref<1x32xf32, #tpu.memory_space<vmem>>, vector<1x32xf32>
    %116 = vector.shape_cast %115 : vector<1x32xf32> to vector<32xf32>
    %117 = vector.shape_cast %116 : vector<32xf32> to vector<1x32xf32>
    %118 = vector.broadcast %117 : vector<1x32xf32> to vector<8x32xf32>
    %119 = arith.mulf %114, %118 : vector<8x32xf32>
    %c0_48 = arith.constant 0 : index
    %c0_49 = arith.constant 0 : index
    %120 = vector.load %arg8[%c0_48, %c0_49] : memref<1x32xf32, #tpu.memory_space<vmem>>, vector<1x32xf32>
    %121 = vector.shape_cast %120 : vector<1x32xf32> to vector<32xf32>
    %122 = vector.shape_cast %121 : vector<32xf32> to vector<1x32xf32>
    %123 = vector.broadcast %122 : vector<1x32xf32> to vector<8x32xf32>
    %124 = arith.addf %119, %123 : vector<8x32xf32>
    %125 = arith.truncf %124 : vector<8x32xf32> to vector<8x32xbf16>
    %c0_50 = arith.constant 0 : index
    %c0_51 = arith.constant 0 : index
    %126 = vector.load %arg9[%c0_50, %c0_51] : memref<32x64xbf16, #tpu.memory_space<vmem>>, vector<32x64xbf16>
    %cst_52 = arith.constant dense<0.000000e+00> : vector<8x64xf32>
    %127 = tpu.matmul %125, %126, %cst_52 {dimension_numbers = #tpu.dot_dimension_numbers<[1], [0], [0], [1], [0, 0, 1, 1], [], []>} : vector<8x32xbf16>, vector<32x64xbf16>, vector<8x64xf32> -> vector<8x64xf32>
    %c0_53 = arith.constant 0 : index
    %c0_54 = arith.constant 0 : index
    %128 = vector.load %arg10[%c0_53, %c0_54] : memref<1x64xf32, #tpu.memory_space<vmem>>, vector<1x64xf32>
    %129 = vector.shape_cast %128 : vector<1x64xf32> to vector<64xf32>
    %130 = vector.shape_cast %129 : vector<64xf32> to vector<1x64xf32>
    %131 = vector.broadcast %130 : vector<1x64xf32> to vector<8x64xf32>
    %132 = arith.addf %127, %131 : vector<8x64xf32>
    %cst_55 = arith.constant 0.000000e+00 : f32
    %133 = vector.broadcast %cst_55 : f32 to vector<8x64xf32>
    %134 = arith.maximumf %132, %133 : vector<8x64xf32>
    %135 = arith.truncf %134 : vector<8x64xf32> to vector<8x64xbf16>
    %c0_56 = arith.constant 0 : index
    %c0_57 = arith.constant 0 : index
    %136 = vector.load %arg11[%c0_56, %c0_57] : memref<64x32xbf16, #tpu.memory_space<vmem>>, vector<64x32xbf16>
    %cst_58 = arith.constant dense<0.000000e+00> : vector<8x32xf32>
    %137 = tpu.matmul %135, %136, %cst_58 {dimension_numbers = #tpu.dot_dimension_numbers<[1], [0], [0], [1], [0, 0, 1, 1], [], []>} : vector<8x64xbf16>, vector<64x32xbf16>, vector<8x32xf32> -> vector<8x32xf32>
    %c0_59 = arith.constant 0 : index
    %c0_60 = arith.constant 0 : index
    %138 = vector.load %arg12[%c0_59, %c0_60] : memref<1x32xf32, #tpu.memory_space<vmem>>, vector<1x32xf32>
    %139 = vector.shape_cast %138 : vector<1x32xf32> to vector<32xf32>
    %140 = vector.shape_cast %139 : vector<32xf32> to vector<1x32xf32>
    %141 = vector.broadcast %140 : vector<1x32xf32> to vector<8x32xf32>
    %142 = arith.addf %137, %141 : vector<8x32xf32>
    %143 = arith.addf %142, %124 : vector<8x32xf32>
    %cst_61 = arith.constant dense<0.000000e+00> : vector<8xf32>
    %144 = vector.multi_reduction <add>, %143, %cst_61 [1] : vector<8x32xf32> to vector<8xf32>
    %145 = vector.shape_cast %144 : vector<8xf32> to vector<8x1xf32>
    %cst_62 = arith.constant 3.200000e+01 : f32
    %146 = vector.broadcast %cst_62 : f32 to vector<8x1xf32>
    %147 = arith.divf %145, %146 : vector<8x1xf32>
    %148 = vector.broadcast %147 : vector<8x1xf32> to vector<8x32xf32>
    %149 = arith.subf %143, %148 : vector<8x32xf32>
    %150 = arith.mulf %149, %149 : vector<8x32xf32>
    %cst_63 = arith.constant dense<0.000000e+00> : vector<8xf32>
    %151 = vector.multi_reduction <add>, %150, %cst_63 [1] : vector<8x32xf32> to vector<8xf32>
    %152 = vector.shape_cast %151 : vector<8xf32> to vector<8x1xf32>
    %cst_64 = arith.constant 3.200000e+01 : f32
    %153 = vector.broadcast %cst_64 : f32 to vector<8x1xf32>
    %154 = arith.divf %152, %153 : vector<8x1xf32>
    %155 = vector.broadcast %147 : vector<8x1xf32> to vector<8x32xf32>
    %156 = arith.subf %143, %155 : vector<8x32xf32>
    %cst_65 = arith.constant 9.99999997E-7 : f32
    %157 = vector.broadcast %cst_65 : f32 to vector<8x1xf32>
    %158 = arith.addf %154, %157 : vector<8x1xf32>
    %159 = math.rsqrt %158 : vector<8x1xf32>
    %160 = vector.broadcast %159 : vector<8x1xf32> to vector<8x32xf32>
    %161 = arith.mulf %156, %160 : vector<8x32xf32>
    %c0_66 = arith.constant 0 : index
    %c0_67 = arith.constant 0 : index
    %162 = vector.load %arg13[%c0_66, %c0_67] : memref<1x32xf32, #tpu.memory_space<vmem>>, vector<1x32xf32>
    %163 = vector.shape_cast %162 : vector<1x32xf32> to vector<32xf32>
    %164 = vector.shape_cast %163 : vector<32xf32> to vector<1x32xf32>
    %165 = vector.broadcast %164 : vector<1x32xf32> to vector<8x32xf32>
    %166 = arith.mulf %161, %165 : vector<8x32xf32>
    %c0_68 = arith.constant 0 : index
    %c0_69 = arith.constant 0 : index
    %167 = vector.load %arg14[%c0_68, %c0_69] : memref<1x32xf32, #tpu.memory_space<vmem>>, vector<1x32xf32>
    %168 = vector.shape_cast %167 : vector<1x32xf32> to vector<32xf32>
    %169 = vector.shape_cast %168 : vector<32xf32> to vector<1x32xf32>
    %170 = vector.broadcast %169 : vector<1x32xf32> to vector<8x32xf32>
    %171 = arith.addf %166, %170 : vector<8x32xf32>
    %c0_70 = arith.constant 0 : index
    %c0_71 = arith.constant 0 : index
    %c0_72 = arith.constant 0 : index
    %172 = vector.load %arg15[%c0_70, %c0_71, %c0_72] : memref<1x8x32xf32, #tpu.memory_space<vmem>>, vector<1x8x32xf32>
    %173 = vector.shape_cast %172 : vector<1x8x32xf32> to vector<8x32xf32>
    %174 = vector.shape_cast %171 : vector<8x32xf32> to vector<1x8x32xf32>
    tpu.vector_store %arg15[%c0_70, %c0_71, %c0_72], %174 {strides = array<i32>} : memref<1x8x32xf32, #tpu.memory_space<vmem>>, vector<1x8x32xf32>,
    return
  }
  func.func @transform_0(%arg0: i32, %arg1: i32) -> (i32, i32, i32) {
    %c0_i32 = arith.constant 0 : i32
    %c0_i32_0 = arith.constant 0 : i32
    %c0_i32_1 = arith.constant 0 : i32
    return %arg0, %c0_i32, %c0_i32_0 : i32, i32, i32
  }
  func.func @transform_1(%arg0: i32, %arg1: i32) -> (i32, i32) {
    %c0_i32 = arith.constant 0 : i32
    %c0_i32_0 = arith.constant 0 : i32
    %c0_i32_1 = arith.constant 0 : i32
    return %c0_i32, %c0_i32_0 : i32, i32
  }
  func.func @transform_2(%arg0: i32, %arg1: i32) -> (i32, i32) {
    %c0_i32 = arith.constant 0 : i32
    %c0_i32_0 = arith.constant 0 : i32
    %c0_i32_1 = arith.constant 0 : i32
    return %c0_i32, %c0_i32_0 : i32, i32
  }
  func.func @transform_3(%arg0: i32, %arg1: i32) -> (i32, i32) {
    %c0_i32 = arith.constant 0 : i32
    %c0_i32_0 = arith.constant 0 : i32
    %c0_i32_1 = arith.constant 0 : i32
    return %c0_i32, %c0_i32_0 : i32, i32
  }
  func.func @transform_4(%arg0: i32, %arg1: i32) -> (i32, i32) {
    %c0_i32 = arith.constant 0 : i32
    %c0_i32_0 = arith.constant 0 : i32
    %c0_i32_1 = arith.constant 0 : i32
    return %c0_i32, %c0_i32_0 : i32, i32
  }
  func.func @transform_5(%arg0: i32, %arg1: i32) -> (i32, i32) {
    %c0_i32 = arith.constant 0 : i32
    %c0_i32_0 = arith.constant 0 : i32
    %c0_i32_1 = arith.constant 0 : i32
    return %c0_i32, %c0_i32_0 : i32, i32
  }
  func.func @transform_6(%arg0: i32, %arg1: i32) -> (i32, i32) {
    %c0_i32 = arith.constant 0 : i32
    %c0_i32_0 = arith.constant 0 : i32
    %c0_i32_1 = arith.constant 0 : i32
    return %c0_i32, %c0_i32_0 : i32, i32
  }
  func.func @transform_7(%arg0: i32, %arg1: i32) -> (i32, i32) {
    %c0_i32 = arith.constant 0 : i32
    %c0_i32_0 = arith.constant 0 : i32
    %c0_i32_1 = arith.constant 0 : i32
    return %c0_i32, %c0_i32_0 : i32, i32
  }
  func.func @transform_8(%arg0: i32, %arg1: i32) -> (i32, i32) {
    %c0_i32 = arith.constant 0 : i32
    %c0_i32_0 = arith.constant 0 : i32
    %c0_i32_1 = arith.constant 0 : i32
    return %c0_i32, %c0_i32_0 : i32, i32
  }
  func.func @transform_9(%arg0: i32, %arg1: i32) -> (i32, i32) {
    %c0_i32 = arith.constant 0 : i32
    %c0_i32_0 = arith.constant 0 : i32
    %c0_i32_1 = arith.constant 0 : i32
    return %c0_i32, %c0_i32_0 : i32, i32
  }
  func.func @transform_10(%arg0: i32, %arg1: i32) -> (i32, i32) {
    %c0_i32 = arith.constant 0 : i32
    %c0_i32_0 = arith.constant 0 : i32
    %c0_i32_1 = arith.constant 0 : i32
    return %c0_i32, %c0_i32_0 : i32, i32
  }
  func.func @transform_11(%arg0: i32, %arg1: i32) -> (i32, i32) {
    %c0_i32 = arith.constant 0 : i32
    %c0_i32_0 = arith.constant 0 : i32
    %c0_i32_1 = arith.constant 0 : i32
    return %c0_i32, %c0_i32_0 : i32, i32
  }
  func.func @transform_12(%arg0: i32, %arg1: i32) -> (i32, i32) {
    %c0_i32 = arith.constant 0 : i32
    %c0_i32_0 = arith.constant 0 : i32
    %c0_i32_1 = arith.constant 0 : i32
    return %c0_i32, %c0_i32_0 : i32, i32
  }
  func.func @transform_13(%arg0: i32, %arg1: i32) -> (i32, i32, i32) {
    %c0_i32 = arith.constant 0 : i32
    %c0_i32_0 = arith.constant 0 : i32
    return %arg0, %arg1, %c0_i32 : i32, i32, i32
  }
  func.func @transform_14(%arg0: i32, %arg1: i32) -> (i32, i32, i32, i32) {
    %c0_i32 = arith.constant 0 : i32
    %c0_i32_0 = arith.constant 0 : i32
    %c0_i32_1 = arith.constant 0 : i32
    return %arg0, %c0_i32, %arg1, %c0_i32_0 : i32, i32, i32, i32
  }
}

</mosaic_0001>

<llo_original>
// kernel: tpu_custom_call.1
$region0: #{tpu_custom_call.1}
  #allocation0 [shape = 'u32[]', space=smem, size = 0x4, offset = 0x4, fixed_abs, tag = 'smem constant byte address 0x4 - core index']
  #allocation1 [shape = 'u32[144,128]{1,0:T(1,128)}', space=vmem, size = 0x12000, scoped, tag = 'internal scratch']
  #allocation2 [shape = 'bf16[8,32]{1,0:T(8,128)(2,1)}', space=vmem, size = 0x800, scoped, tag = 'scratch operand']
  #allocation3 [shape = 'bf16[8,32]{1,0:T(8,128)(2,1)}', space=vmem, size = 0x800, scoped, tag = 'scratch operand']
  %s0 = inlined_call_operand.hbm [shape: f32[2,8,32], index: 0, kind: input, shape index: {}]
  %s1 = inlined_call_operand.hbm [shape: bf16[32,32], index: 1, kind: input, shape index: {}]
  %s2 = inlined_call_operand.hbm [shape: bf16[32,32], index: 2, kind: input, shape index: {}]
  %s3 = inlined_call_operand.hbm [shape: bf16[32,32], index: 3, kind: input, shape index: {}]
  %s4 = inlined_call_operand.hbm [shape: bf16[32,32], index: 4, kind: input, shape index: {}]
  %s5 = inlined_call_operand.hbm [shape: f32[1,32], index: 5, kind: input, shape index: {}]
  %s6 = inlined_call_operand.hbm [shape: f32[1,32], index: 6, kind: input, shape index: {}]
  %s7 = inlined_call_operand.hbm [shape: bf16[32,64], index: 7, kind: input, shape index: {}]
  %s8 = inlined_call_operand.hbm [shape: f32[1,64], index: 8, kind: input, shape index: {}]
  %s9 = inlined_call_operand.hbm [shape: bf16[64,32], index: 9, kind: input, shape index: {}]
  %s10 = inlined_call_operand.hbm [shape: f32[1,32], index: 10, kind: input, shape index: {}]
  %s11 = inlined_call_operand.hbm [shape: f32[1,32], index: 11, kind: input, shape index: {}]
  %s12 = inlined_call_operand.hbm [shape: f32[1,32], index: 12, kind: input, shape index: {}]
  %s13 = inlined_call_operand.hbm [shape: f32[2,8,32], index: 13, kind: output, shape index: {0}]
  %s14 = inlined_call_operand.hbm [shape: f32[2,4,8,8], index: 14, kind: output, shape index: {1}]
  %15 = xla_tuple %s13, %s14
  %s16 = sld [smem:[#allocation0]]
  $region149: #{tpu_custom_call.1} parent=0
    _
  %s18 = ssub.s32 1, %s16
  %s19 = scalar_select 0, %s18, %s16
  $region1: #{tpu_custom_call.1} parent=0
    #allocation4 [shape = 'u8[8192]{0}', space=vmem, size = 0x2000, scoped, tag = 'input window, operand 0']
    #allocation5 [shape = 's32[2]{0}', space=sflag, size = 0x8, scoped, tag = 'scoped memory for tpu_custom_call.1']
    #allocation6 [shape = 's32[2]{0}', space=sflag, size = 0x8, scoped, tag = 'scoped memory for tpu_custom_call.1']
    #allocation7 [shape = 'u8[8192]{0}', space=vmem, size = 0x2000, scoped, tag = 'input window, operand 1, single buffered']
    #allocation8 [shape = 's32[1]{0}', space=sflag, size = 0x4, scoped, tag = 'scoped memory for tpu_custom_call.1']
    #allocation9 [shape = 'u8[8192]{0}', space=vmem, size = 0x2000, scoped, tag = 'input window, operand 2, single buffered']
    #allocation10 [shape = 'u8[8192]{0}', space=vmem, size = 0x2000, scoped, tag = 'input window, operand 3, single buffered']
    #allocation11 [shape = 's32[1]{0}', space=sflag, size = 0x4, scoped, tag = 'scoped memory for tpu_custom_call.1']
    #allocation12 [shape = 'u8[8192]{0}', space=vmem, size = 0x2000, scoped, tag = 'input window, operand 4, single buffered']
    #allocation13 [shape = 'u8[512]{0}', space=vmem, size = 0x400, scoped, tag = 'input window, operand 5, single buffered']
    #allocation14 [shape = 's32[1]{0}', space=sflag, size = 0x4, scoped, tag = 'scoped memory for tpu_custom_call.1']
    #allocation15 [shape = 'u8[512]{0}', space=vmem, size = 0x400, scoped, tag = 'input window, operand 6, single buffered']
    #allocation16 [shape = 'u8[8192]{0}', space=vmem, size = 0x2000, scoped, tag = 'input window, operand 7, single buffered']
    #allocation17 [shape = 's32[1]{0}', space=sflag, size = 0x4, scoped, tag = 'scoped memory for tpu_custom_call.1']
    #allocation18 [shape = 'u8[512]{0}', space=vmem, size = 0x400, scoped, tag = 'input window, operand 8, single buffered']
    #allocation19 [shape = 'u8[16384]{0}', space=vmem, size = 0x4000, scoped, tag = 'input window, operand 9, single buffered']
    #allocation20 [shape = 's32[1]{0}', space=sflag, size = 0x4, scoped, tag = 'scoped memory for tpu_custom_call.1']
    #allocation21 [shape = 'u8[512]{0}', space=vmem, size = 0x400, scoped, tag = 'input window, operand 10, single buffered']
    #allocation22 [shape = 'u8[512]{0}', space=vmem, size = 0x400, scoped, tag = 'input window, operand 11, single buffered']
    #allocation23 [shape = 's32[1]{0}', space=sflag, size = 0x4, scoped, tag = 'scoped memory for tpu_custom_call.1']
    #allocation24 [shape = 'u8[512]{0}', space=vmem, size = 0x400, scoped, tag = 'input window, operand 12, single buffered']
    #allocation25 [shape = 'u8[8192]{0}', space=vmem, size = 0x2000, scoped, tag = 'output window, operand 0']
    #allocation26 [shape = 'u8[32768]{0}', space=vmem, size = 0x8000, scoped, tag = 'output window, operand 1']
    #allocation27 [shape = 's32[2]{0}', space=sflag, size = 0x8, scoped, tag = 'scoped memory for tpu_custom_call.1']
    %20 = vsyncpa [#allocation5], 0
    %s21 = scalar_lea.sflag [#allocation5], 1
    %22 = vsyncpa %s21, 0
    %23 = vsyncpa [#allocation8], 0
    %24 = vsyncpa [#allocation11], 0
    %25 = vsyncpa [#allocation14], 0
    %26 = vsyncpa [#allocation17], 0
    %27 = vsyncpa [#allocation20], 0
    %28 = vsyncpa [#allocation23], 0
    %29 = vsyncpa [#allocation6], 0
    %s30 = scalar_lea.sflag [#allocation6], 1
    %31 = vsyncpa %s30, 0
    %32 = vsyncpa [#allocation27], 0
    %s33 = scalar_lea.sflag [#allocation27], 1
    %34 = vsyncpa %s33, 0
    loop: start=0, step=1, limit=4
    $region2: #{tpu_custom_call.1} parent=1 // loop_pre_header
      _
    $region3: #{tpu_custom_call.1} parent=1 // loop_header
      %s36 = sphi 0, %s40
      %p37 = scmp.ge.s32.totalorder %s36, 4
      %s43 = sphi 0, %s55
      %s44 = sphi 0, %s51
      %s45 = sphi 0, %s43
      %s46 = sphi 0, %s44
      %s47 = sphi 0, %s45
      %s48 = sphi 0, %s46
      %s58 = sphi 0, %s60
      %s61 = sphi 0, %s58
      %s62 = sphi 0, %s61
      %s78 = sphi 0, %s62
      %s82 = sphi 0, %s82
      %s84 = sphi 0, %s82
      %s85 = sphi 0, %s84
      %s99 = sphi 0, %s85
      %s103 = sphi 0, %s103
      %s105 = sphi 0, %s103
      %s106 = sphi 0, %s105
      %s120 = sphi 0, %s106
      %s124 = sphi 0, %s124
      %s126 = sphi 0, %s124
      %s127 = sphi 0, %s126
      %s141 = sphi 0, %s127
      %s145 = sphi 0, %s145
      %s147 = sphi 0, %s145
      %s148 = sphi 0, %s147
      %s162 = sphi 0, %s148
      %s166 = sphi 0, %s166
      %s168 = sphi 0, %s166
      %s169 = sphi 0, %s168
      %s183 = sphi 0, %s169
      %s187 = sphi 0, %s187
      %s189 = sphi 0, %s187
      %s190 = sphi 0, %s189
      %s204 = sphi 0, %s190
      %s208 = sphi 0, %s208
      %s210 = sphi 0, %s208
      %s211 = sphi 0, %s210
      %s225 = sphi 0, %s211
      %s229 = sphi 0, %s229
      %s231 = sphi 0, %s229
      %s232 = sphi 0, %s231
      %s246 = sphi 0, %s232
      %s250 = sphi 0, %s250
      %s252 = sphi 0, %s250
      %s253 = sphi 0, %s252
      %s267 = sphi 0, %s253
      %s271 = sphi 0, %s271
      %s273 = sphi 0, %s271
      %s274 = sphi 0, %s273
      %s288 = sphi 0, %s274
      %s292 = sphi 0, %s292
      %s294 = sphi 0, %s292
      %s295 = sphi 0, %s294
      %s309 = sphi 0, %s295
      %s313 = sphi 0, %s313
      %s315 = sphi 0, %s313
      %s316 = sphi 0, %s315
      %s330 = sphi 0, %s316
      %s338 = sphi 0, %s340
      %s341 = sphi 0, %s338
      %s342 = sphi 0, %s341
      %s358 = sphi 0, %s342
      %s366 = sphi 0, %s368
      %s369 = sphi 0, %s366
      %s370 = sphi 0, %s369
      %s386 = sphi 0, %s370
    $region4: #{tpu_custom_call.1} parent=1 // loop_header_branch
      %39 = sbr.rel (%p37) target = $region8
    $region5: #{tpu_custom_call.1} parent=1 // loop_body
      %s41 = ssub.s32 %s36, 1
      %s42 = ssub.s32 %s36, 2
      %s49 = sadd.s32 1, %s44
      %p50 = scmp.ge.s32.totalorder %s49, 1
      %s51 = scalar_select %p50, 0, %s49
      %s52 = sadd.s32 1, %s43
      %s53 = scalar_select %p50, %s52, %s43
      %p54 = scmp.ge.s32.totalorder %s53, 2
      %s55 = scalar_select %p54, 0, %s53
      %s56 = ssub.s32 %s43, %s55
      %p57 = scmp.eq.s32.totalorder %s56, 0
      %s59 = sadd.s32 %s58, 1
      %s60 = scalar_select %p57, %s58, %s59
      %p63 = pneg %p57
      %p64 = scmp.eq.s32.totalorder %s36, 1
      %p65 = por %p63, %p64
      %p66 = scmp.ne.s32.totalorder %s58, %s61
      %p67 = scmp.eq.s32.totalorder %s36, 0
      %p68 = por %p66, %p67
      %p69 = scmp.ne.s32.totalorder %s58, %s61
      %p70 = scmp.eq.s32.totalorder %s41, 1
      %p71 = por %p69, %p70
      %p72 = scmp.ne.s32.totalorder %s61, %s62
      %p73 = scmp.eq.s32.totalorder %s41, 0
      %p74 = por %p72, %p73
      %p75 = scmp.ne.s32.totalorder %s61, %s62
      %p76 = scmp.eq.s32.totalorder %s42, 1
      %p77 = por %p75, %p76
      %p79 = scmp.ne.s32.totalorder %s62, %s78
      %p80 = scmp.eq.s32.totalorder %s42, 0
      %p81 = por %p79, %p80
      %s83 = sadd.s32 %s82, 1
      %p86 = scmp.eq.s32.totalorder %s36, 1
      %p87 = scmp.ne.s32.totalorder %s82, %s84
      %p88 = scmp.eq.s32.totalorder %s36, 0
      %p89 = por %p87, %p88
      %p90 = scmp.ne.s32.totalorder %s82, %s84
      %p91 = scmp.eq.s32.totalorder %s41, 1
      %p92 = por %p90, %p91
      %p93 = scmp.ne.s32.totalorder %s84, %s85
      %p94 = scmp.eq.s32.totalorder %s41, 0
      %p95 = por %p93, %p94
      %p96 = scmp.ne.s32.totalorder %s84, %s85
      %p97 = scmp.eq.s32.totalorder %s42, 1
      %p98 = por %p96, %p97
      %p100 = scmp.ne.s32.totalorder %s85, %s99
      %p101 = scmp.eq.s32.totalorder %s42, 0
      %p102 = por %p100, %p101
      %s104 = sadd.s32 %s103, 1
      %p107 = scmp.eq.s32.totalorder %s36, 1
      %p108 = scmp.ne.s32.totalorder %s103, %s105
      %p109 = scmp.eq.s32.totalorder %s36, 0
      %p110 = por %p108, %p109
      %p111 = scmp.ne.s32.totalorder %s103, %s105
      %p112 = scmp.eq.s32.totalorder %s41, 1
      %p113 = por %p111, %p112
      %p114 = scmp.ne.s32.totalorder %s105, %s106
      %p115 = scmp.eq.s32.totalorder %s41, 0
      %p116 = por %p114, %p115
      %p117 = scmp.ne.s32.totalorder %s105, %s106
      %p118 = scmp.eq.s32.totalorder %s42, 1
      %p119 = por %p117, %p118
      %p121 = scmp.ne.s32.totalorder %s106, %s120
      %p122 = scmp.eq.s32.totalorder %s42, 0
      %p123 = por %p121, %p122
      %s125 = sadd.s32 %s124, 1
      %p128 = scmp.eq.s32.totalorder %s36, 1
      %p129 = scmp.ne.s32.totalorder %s124, %s126
      %p130 = scmp.eq.s32.totalorder %s36, 0
      %p131 = por %p129, %p130
      %p132 = scmp.ne.s32.totalorder %s124, %s126
      %p133 = scmp.eq.s32.totalorder %s41, 1
      %p134 = por %p132, %p133
      %p135 = scmp.ne.s32.totalorder %s126, %s127
      %p136 = scmp.eq.s32.totalorder %s41, 0
      %p137 = por %p135, %p136
      %p138 = scmp.ne.s32.totalorder %s126, %s127
      %p139 = scmp.eq.s32.totalorder %s42, 1
      %p140 = por %p138, %p139
      %p142 = scmp.ne.s32.totalorder %s127, %s141
      %p143 = scmp.eq.s32.totalorder %s42, 0
      %p144 = por %p142, %p143
      %s146 = sadd.s32 %s145, 1
      %p149 = scmp.eq.s32.totalorder %s36, 1
      %p150 = scmp.ne.s32.totalorder %s145, %s147
      %p151 = scmp.eq.s32.totalorder %s36, 0
      %p152 = por %p150, %p151
      %p153 = scmp.ne.s32.totalorder %s145, %s147
      %p154 = scmp.eq.s32.totalorder %s41, 1
      %p155 = por %p153, %p154
      %p156 = scmp.ne.s32.totalorder %s147, %s148
      %p157 = scmp.eq.s32.totalorder %s41, 0
      %p158 = por %p156, %p157
      %p159 = scmp.ne.s32.totalorder %s147, %s148
      %p160 = scmp.eq.s32.totalorder %s42, 1
      %p161 = por %p159, %p160
      %p163 = scmp.ne.s32.totalorder %s148, %s162
      %p164 = scmp.eq.s32.totalorder %s42, 0
      %p165 = por %p163, %p164
      %s167 = sadd.s32 %s166, 1
      %p170 = scmp.eq.s32.totalorder %s36, 1
      %p171 = scmp.ne.s32.totalorder %s166, %s168
      %p172 = scmp.eq.s32.totalorder %s36, 0
      %p173 = por %p171, %p172
      %p174 = scmp.ne.s32.totalorder %s166, %s168
      %p175 = scmp.eq.s32.totalorder %s41, 1
      %p176 = por %p174, %p175
      %p177 = scmp.ne.s32.totalorder %s168, %s169
      %p178 = scmp.eq.s32.totalorder %s41, 0
      %p179 = por %p177, %p178
      %p180 = scmp.ne.s32.totalorder %s168, %s169
      %p181 = scmp.eq.s32.totalorder %s42, 1
      %p182 = por %p180, %p181
      %p184 = scmp.ne.s32.totalorder %s169, %s183
      %p185 = scmp.eq.s32.totalorder %s42, 0
      %p186 = por %p184, %p185
      %s188 = sadd.s32 %s187, 1
      %p191 = scmp.eq.s32.totalorder %s36, 1
      %p192 = scmp.ne.s32.totalorder %s187, %s189
      %p193 = scmp.eq.s32.totalorder %s36, 0
      %p194 = por %p192, %p193
      %p195 = scmp.ne.s32.totalorder %s187, %s189
      %p196 = scmp.eq.s32.totalorder %s41, 1
      %p197 = por %p195, %p196
      %p198 = scmp.ne.s32.totalorder %s189, %s190
      %p199 = scmp.eq.s32.totalorder %s41, 0
      %p200 = por %p198, %p199
      %p201 = scmp.ne.s32.totalorder %s189, %s190
      %p202 = scmp.eq.s32.totalorder %s42, 1
      %p203 = por %p201, %p202
      %p205 = scmp.ne.s32.totalorder %s190, %s204
      %p206 = scmp.eq.s32.totalorder %s42, 0
      %p207 = por %p205, %p206
      %s209 = sadd.s32 %s208, 1
      %p212 = scmp.eq.s32.totalorder %s36, 1
      %p213 = scmp.ne.s32.totalorder %s208, %s210
      %p214 = scmp.eq.s32.totalorder %s36, 0
      %p215 = por %p213, %p214
      %p216 = scmp.ne.s32.totalorder %s208, %s210
      %p217 = scmp.eq.s32.totalorder %s41, 1
      %p218 = por %p216, %p217
      %p219 = scmp.ne.s32.totalorder %s210, %s211
      %p220 = scmp.eq.s32.totalorder %s41, 0
      %p221 = por %p219, %p220
      %p222 = scmp.ne.s32.totalorder %s210, %s211
      %p223 = scmp.eq.s32.totalorder %s42, 1
      %p224 = por %p222, %p223
      %p226 = scmp.ne.s32.totalorder %s211, %s225
      %p227 = scmp.eq.s32.totalorder %s42, 0
      %p228 = por %p226, %p227
      %s230 = sadd.s32 %s229, 1
      %p233 = scmp.eq.s32.totalorder %s36, 1
      %p234 = scmp.ne.s32.totalorder %s229, %s231
      %p235 = scmp.eq.s32.totalorder %s36, 0
      %p236 = por %p234, %p235
      %p237 = scmp.ne.s32.totalorder %s229, %s231
      %p238 = scmp.eq.s32.totalorder %s41, 1
      %p239 = por %p237, %p238
      %p240 = scmp.ne.s32.totalorder %s231, %s232
      %p241 = scmp.eq.s32.totalorder %s41, 0
      %p242 = por %p240, %p241
      %p243 = scmp.ne.s32.totalorder %s231, %s232
      %p244 = scmp.eq.s32.totalorder %s42, 1
      %p245 = por %p243, %p244
      %p247 = scmp.ne.s32.totalorder %s232, %s246
      %p248 = scmp.eq.s32.totalorder %s42, 0
      %p249 = por %p247, %p248
      %s251 = sadd.s32 %s250, 1
      %p254 = scmp.eq.s32.totalorder %s36, 1
      %p255 = scmp.ne.s32.totalorder %s250, %s252
      %p256 = scmp.eq.s32.totalorder %s36, 0
      %p257 = por %p255, %p256
      %p258 = scmp.ne.s32.totalorder %s250, %s252
      %p259 = scmp.eq.s32.totalorder %s41, 1
      %p260 = por %p258, %p259
      %p261 = scmp.ne.s32.totalorder %s252, %s253
      %p262 = scmp.eq.s32.totalorder %s41, 0
      %p263 = por %p261, %p262
      %p264 = scmp.ne.s32.totalorder %s252, %s253
      %p265 = scmp.eq.s32.totalorder %s42, 1
      %p266 = por %p264, %p265
      %p268 = scmp.ne.s32.totalorder %s253, %s267
      %p269 = scmp.eq.s32.totalorder %s42, 0
      %p270 = por %p268, %p269
      %s272 = sadd.s32 %s271, 1
      %p275 = scmp.eq.s32.totalorder %s36, 1
      %p276 = scmp.ne.s32.totalorder %s271, %s273
      %p277 = scmp.eq.s32.totalorder %s36, 0
      %p278 = por %p276, %p277
      %p279 = scmp.ne.s32.totalorder %s271, %s273
      %p280 = scmp.eq.s32.totalorder %s41, 1
      %p281 = por %p279, %p280
      %p282 = scmp.ne.s32.totalorder %s273, %s274
      %p283 = scmp.eq.s32.totalorder %s41, 0
      %p284 = por %p282, %p283
      %p285 = scmp.ne.s32.totalorder %s273, %s274
      %p286 = scmp.eq.s32.totalorder %s42, 1
      %p287 = por %p285, %p286
      %p289 = scmp.ne.s32.totalorder %s274, %s288
      %p290 = scmp.eq.s32.totalorder %s42, 0
      %p291 = por %p289, %p290
      %s293 = sadd.s32 %s292, 1
      %p296 = scmp.eq.s32.totalorder %s36, 1
      %p297 = scmp.ne.s32.totalorder %s292, %s294
      %p298 = scmp.eq.s32.totalorder %s36, 0
      %p299 = por %p297, %p298
      %p300 = scmp.ne.s32.totalorder %s292, %s294
      %p301 = scmp.eq.s32.totalorder %s41, 1
      %p302 = por %p300, %p301
      %p303 = scmp.ne.s32.totalorder %s294, %s295
      %p304 = scmp.eq.s32.totalorder %s41, 0
      %p305 = por %p303, %p304
      %p306 = scmp.ne.s32.totalorder %s294, %s295
      %p307 = scmp.eq.s32.totalorder %s42, 1
      %p308 = por %p306, %p307
      %p310 = scmp.ne.s32.totalorder %s295, %s309
      %p311 = scmp.eq.s32.totalorder %s42, 0
      %p312 = por %p310, %p311
      %s314 = sadd.s32 %s313, 1
      %p317 = scmp.eq.s32.totalorder %s36, 1
      %p318 = scmp.ne.s32.totalorder %s313, %s315
      %p319 = scmp.eq.s32.totalorder %s36, 0
      %p320 = por %p318, %p319
      %p321 = scmp.ne.s32.totalorder %s313, %s315
      %p322 = scmp.eq.s32.totalorder %s41, 1
      %p323 = por %p321, %p322
      %p324 = scmp.ne.s32.totalorder %s315, %s316
      %p325 = scmp.eq.s32.totalorder %s41, 0
      %p326 = por %p324, %p325
      %p327 = scmp.ne.s32.totalorder %s315, %s316
      %p328 = scmp.eq.s32.totalorder %s42, 1
      %p329 = por %p327, %p328
      %p331 = scmp.ne.s32.totalorder %s316, %s330
      %p332 = scmp.eq.s32.totalorder %s42, 0
      %p333 = por %p331, %p332
      %s334 = ssub.s32 %s43, %s55
      %s335 = ssub.s32 %s44, %s51
      %s336 = sor.u32 %s334, %s335
      %p337 = scmp.eq.s32.totalorder %s336, 0
      %s339 = sadd.s32 %s338, 1
      %s340 = scalar_select %p337, %s338, %s339
      %p343 = pneg %p337
      %p344 = scmp.eq.s32.totalorder %s36, 1
      %p345 = por %p343, %p344
      %p346 = scmp.ne.s32.totalorder %s338, %s341
      %p347 = scmp.eq.s32.totalorder %s36, 0
      %p348 = por %p346, %p347
      %p349 = scmp.ne.s32.totalorder %s338, %s341
      %p350 = scmp.eq.s32.totalorder %s41, 1
      %p351 = por %p349, %p350
      %p352 = scmp.ne.s32.totalorder %s341, %s342
      %p353 = scmp.eq.s32.totalorder %s41, 0
      %p354 = por %p352, %p353
      %p355 = scmp.ne.s32.totalorder %s341, %s342
      %p356 = scmp.eq.s32.totalorder %s42, 1
      %p357 = por %p355, %p356
      %p359 = scmp.ne.s32.totalorder %s342, %s358
      %p360 = scmp.eq.s32.totalorder %s42, 0
      %p361 = por %p359, %p360
      %s362 = ssub.s32 %s43, %s55
      %s363 = ssub.s32 %s44, %s51
      %s364 = sor.u32 %s362, %s363
      %p365 = scmp.eq.s32.totalorder %s364, 0
      %s367 = sadd.s32 %s366, 1
      %s368 = scalar_select %p365, %s366, %s367
      %p371 = pneg %p365
      %p372 = scmp.eq.s32.totalorder %s36, 1
      %p373 = por %p371, %p372
      %p374 = scmp.ne.s32.totalorder %s366, %s369
      %p375 = scmp.eq.s32.totalorder %s36, 0
      %p376 = por %p374, %p375
      %p377 = scmp.ne.s32.totalorder %s366, %s369
      %p378 = scmp.eq.s32.totalorder %s41, 1
      %p379 = por %p377, %p378
      %p380 = scmp.ne.s32.totalorder %s369, %s370
      %p381 = scmp.eq.s32.totalorder %s41, 0
      %p382 = por %p380, %p381
      %p383 = scmp.ne.s32.totalorder %s369, %s370
      %p384 = scmp.eq.s32.totalorder %s42, 1
      %p385 = por %p383, %p384
      %p387 = scmp.ne.s32.totalorder %s370, %s386
      %p388 = scmp.eq.s32.totalorder %s42, 0
      %p389 = por %p387, %p388
      %p390 = scmp.le.s32.totalorder 1, %s36
      %p391 = scmp.lt.s32.totalorder %s36, 3
      %p392 = pnand %p390, %p391
      %p393 = pneg %p392
      // Predicated region
      $region9: #{tpu_custom_call.1} parent=5 // pred_check
        _
      $region10: #{tpu_custom_call.1} parent=5 // pred_check_branch
        %395 = sbr.rel (%p392) target = $region12
      $region11: #{tpu_custom_call.1} parent=5 // pred_region
        %s396 = ssub.s32 %s36, 1
        // Predicated region
        $region13: #{tpu_custom_call.1} parent=11 // pred_check
          %p397 = pneg %p95
        $region14: #{tpu_custom_call.1} parent=11 // pred_check_branch
          %399 = sbr.rel (%p397) target = $region16
        $region15: #{tpu_custom_call.1} parent=11 // pred_region
          %s401 = ssub.s32 256, 256
          %402 = vsyncadd [#allocation8], %s401
          %s403 = sshll.u32 [#allocation7], 4
          %s404 = int_to_ptr.vmem [resolvable:$true] %s403
          %409 = dma.hbm_to_vmem [thread:$0]  %s1, 256, %s404, [#allocation8], 64, 64, 4
        $region16: #{tpu_custom_call.1} parent=11 // pred_fallthru
          _
        // Predicated region
        $region17: #{tpu_custom_call.1} parent=11 // pred_check
          %p410 = pneg %p116
        $region18: #{tpu_custom_call.1} parent=11 // pred_check_branch
          %412 = sbr.rel (%p410) target = $region20
        $region19: #{tpu_custom_call.1} parent=11 // pred_region
          %s414 = ssub.s32 256, 256
          %415 = vsyncadd [#allocation8], %s414
          %s416 = sshll.u32 [#allocation9], 4
          %s417 = int_to_ptr.vmem [resolvable:$true] %s416
          %422 = dma.hbm_to_vmem [thread:$0]  %s2, 256, %s417, [#allocation8], 64, 64, 4
        $region20: #{tpu_custom_call.1} parent=11 // pred_fallthru
          _
        // Predicated region
        $region21: #{tpu_custom_call.1} parent=11 // pred_check
          %p423 = pneg %p137
        $region22: #{tpu_custom_call.1} parent=11 // pred_check_branch
          %425 = sbr.rel (%p423) target = $region24
        $region23: #{tpu_custom_call.1} parent=11 // pred_region
          %s427 = ssub.s32 256, 256
          %428 = vsyncadd [#allocation11], %s427
          %s429 = sshll.u32 [#allocation10], 4
          %s430 = int_to_ptr.vmem [resolvable:$true] %s429
          %435 = dma.hbm_to_vmem [thread:$0]  %s3, 256, %s430, [#allocation11], 64, 64, 4
        $region24: #{tpu_custom_call.1} parent=11 // pred_fallthru
          _
        // Predicated region
        $region25: #{tpu_custom_call.1} parent=11 // pred_check
          %p436 = pneg %p158
        $region26: #{tpu_custom_call.1} parent=11 // pred_check_branch
          %438 = sbr.rel (%p436) target = $region28
        $region27: #{tpu_custom_call.1} parent=11 // pred_region
          %s440 = ssub.s32 256, 256
          %441 = vsyncadd [#allocation11], %s440
          %s442 = sshll.u32 [#allocation12], 4
          %s443 = int_to_ptr.vmem [resolvable:$true] %s442
          %448 = dma.hbm_to_vmem [thread:$0]  %s4, 256, %s443, [#allocation11], 64, 64, 4
        $region28: #{tpu_custom_call.1} parent=11 // pred_fallthru
          _
        // Predicated region
        $region29: #{tpu_custom_call.1} parent=11 // pred_check
          %p449 = pneg %p179
        $region30: #{tpu_custom_call.1} parent=11 // pred_check_branch
          %451 = sbr.rel (%p449) target = $region32
        $region31: #{tpu_custom_call.1} parent=11 // pred_region
          %s453 = ssub.s32 16, 16
          %454 = vsyncadd [#allocation14], %s453
          %s456 = sshll.u32 [#allocation13], 4
          %s457 = int_to_ptr.vmem [resolvable:$true] %s456
          %459 = dma.hbm_to_vmem [thread:$0]  %s5, 16, %s457, [#allocation14]
        $region32: #{tpu_custom_call.1} parent=11 // pred_fallthru
          _
        // Predicated region
        $region33: #{tpu_custom_call.1} parent=11 // pred_check
          %p460 = pneg %p200
        $region34: #{tpu_custom_call.1} parent=11 // pred_check_branch
          %462 = sbr.rel (%p460) target = $region36
        $region35: #{tpu_custom_call.1} parent=11 // pred_region
          %s464 = ssub.s32 16, 16
          %465 = vsyncadd [#allocation14], %s464
          %s467 = sshll.u32 [#allocation15], 4
          %s468 = int_to_ptr.vmem [resolvable:$true] %s467
          %470 = dma.hbm_to_vmem [thread:$0]  %s6, 16, %s468, [#allocation14]
        $region36: #{tpu_custom_call.1} parent=11 // pred_fallthru
          _
        // Predicated region
        $region37: #{tpu_custom_call.1} parent=11 // pred_check
          %p471 = pneg %p221
        $region38: #{tpu_custom_call.1} parent=11 // pred_check_branch
          %473 = sbr.rel (%p471) target = $region40
        $region39: #{tpu_custom_call.1} parent=11 // pred_region
          %s475 = ssub.s32 256, 256
          %476 = vsyncadd [#allocation17], %s475
          %s477 = sshll.u32 [#allocation16], 4
          %s478 = int_to_ptr.vmem [resolvable:$true] %s477
          %483 = dma.hbm_to_vmem [thread:$0]  %s7, 256, %s478, [#allocation17], 64, 64, 4
        $region40: #{tpu_custom_call.1} parent=11 // pred_fallthru
          _
        // Predicated region
        $region41: #{tpu_custom_call.1} parent=11 // pred_check
          %p484 = pneg %p242
        $region42: #{tpu_custom_call.1} parent=11 // pred_check_branch
          %486 = sbr.rel (%p484) target = $region44
        $region43: #{tpu_custom_call.1} parent=11 // pred_region
          %s488 = ssub.s32 16, 16
          %489 = vsyncadd [#allocation17], %s488
          %s491 = sshll.u32 [#allocation18], 4
          %s492 = int_to_ptr.vmem [resolvable:$true] %s491
          %494 = dma.hbm_to_vmem [thread:$0]  %s8, 16, %s492, [#allocation17]
        $region44: #{tpu_custom_call.1} parent=11 // pred_fallthru
          _
        // Predicated region
        $region45: #{tpu_custom_call.1} parent=11 // pred_check
          %p495 = pneg %p263
        $region46: #{tpu_custom_call.1} parent=11 // pred_check_branch
          %497 = sbr.rel (%p495) target = $region48
        $region47: #{tpu_custom_call.1} parent=11 // pred_region
          %s499 = ssub.s32 512, 512
          %500 = vsyncadd [#allocation20], %s499
          %s501 = sshll.u32 [#allocation19], 4
          %s502 = int_to_ptr.vmem [resolvable:$true] %s501
          %507 = dma.hbm_to_vmem [thread:$0]  %s9, 512, %s502, [#allocation20], 64, 64, 4
        $region48: #{tpu_custom_call.1} parent=11 // pred_fallthru
          _
        // Predicated region
        $region49: #{tpu_custom_call.1} parent=11 // pred_check
          %p508 = pneg %p284
        $region50: #{tpu_custom_call.1} parent=11 // pred_check_branch
          %510 = sbr.rel (%p508) target = $region52
        $region51: #{tpu_custom_call.1} parent=11 // pred_region
          %s512 = ssub.s32 16, 16
          %513 = vsyncadd [#allocation20], %s512
          %s515 = sshll.u32 [#allocation21], 4
          %s516 = int_to_ptr.vmem [resolvable:$true] %s515
          %518 = dma.hbm_to_vmem [thread:$0]  %s10, 16, %s516, [#allocation20]
        $region52: #{tpu_custom_call.1} parent=11 // pred_fallthru
          _
        // Predicated region
        $region53: #{tpu_custom_call.1} parent=11 // pred_check
          %p519 = pneg %p305
        $region54: #{tpu_custom_call.1} parent=11 // pred_check_branch
          %521 = sbr.rel (%p519) target = $region56
        $region55: #{tpu_custom_call.1} parent=11 // pred_region
          %s523 = ssub.s32 16, 16
          %524 = vsyncadd [#allocation23], %s523
          %s526 = sshll.u32 [#allocation22], 4
          %s527 = int_to_ptr.vmem [resolvable:$true] %s526
          %529 = dma.hbm_to_vmem [thread:$0]  %s11, 16, %s527, [#allocation23]
        $region56: #{tpu_custom_call.1} parent=11 // pred_fallthru
          _
        // Predicated region
        $region57: #{tpu_custom_call.1} parent=11 // pred_check
          %p530 = pneg %p326
        $region58: #{tpu_custom_call.1} parent=11 // pred_check_branch
          %532 = sbr.rel (%p530) target = $region60
        $region59: #{tpu_custom_call.1} parent=11 // pred_region
          %s534 = ssub.s32 16, 16
          %535 = vsyncadd [#allocation23], %s534
          %s537 = sshll.u32 [#allocation24], 4
          %s538 = int_to_ptr.vmem [resolvable:$true] %s537
          %540 = dma.hbm_to_vmem [thread:$0]  %s12, 16, %s538, [#allocation23]
        $region60: #{tpu_custom_call.1} parent=11 // pred_fallthru
          _
      $region12: #{tpu_custom_call.1} parent=5 // pred_fallthru
        _
      %p541 = scmp.lt.s32.totalorder %s36, 2
      // Predicated region
      $region61: #{tpu_custom_call.1} parent=5 // pred_check
        %p542 = pneg %p541
      $region62: #{tpu_custom_call.1} parent=5 // pred_check_branch
        %544 = sbr.rel (%p542) target = $region64
      $region63: #{tpu_custom_call.1} parent=5 // pred_region
        // Predicated region
        $region65: #{tpu_custom_call.1} parent=63 // pred_check
          %p545 = pneg %p68
        $region66: #{tpu_custom_call.1} parent=63 // pred_check_branch
          %547 = sbr.rel (%p545) target = $region68
        $region67: #{tpu_custom_call.1} parent=63 // pred_region
          %s548 = sand.u32 %s58, 1
          %s549 = scalar_lea.sflag [#allocation5], %s548
          %s550 = sand.u32 %s58, 1
          %s551 = smul.addr %s550, 8
          %s552 = scalar_lea.vmem [#allocation4], %s551
          %s554 = ssub.s32 128, 128
          %555 = vsyncadd %s549, %s554
          %s556 = smul.addr %s43, 128
          %s557 = scalar_lea.hbm %s0, %s556
          %s559 = sshll.u32 %s552, 4
          %s560 = int_to_ptr.vmem [resolvable:$true] %s559
          %562 = dma.hbm_to_vmem [thread:$0]  %s557, 128, %s560, %s549
        $region68: #{tpu_custom_call.1} parent=63 // pred_fallthru
          _
      $region64: #{tpu_custom_call.1} parent=5 // pred_fallthru
        _
      %p563 = scmp.le.s32.totalorder 1, %s36
      %p564 = scmp.lt.s32.totalorder %s36, 3
      %p565 = pnand %p563, %p564
      %p566 = pneg %p565
      // Predicated region
      $region69: #{tpu_custom_call.1} parent=5 // pred_check
        _
      $region70: #{tpu_custom_call.1} parent=5 // pred_check_branch
        %568 = sbr.rel (%p565) target = $region72
      $region71: #{tpu_custom_call.1} parent=5 // pred_region
        %s569 = ssub.s32 %s36, 1
        %s570 = sand.u32 %s61, 1
        %s571 = scalar_lea.sflag [#allocation5], %s570
        %s572 = sand.u32 %s61, 1
        %s573 = smul.addr %s572, 8
        %s574 = scalar_lea.vmem [#allocation4], %s573
        // Predicated region
        $region73: #{tpu_custom_call.1} parent=71 // pred_check
          %p575 = pneg %p74
        $region74: #{tpu_custom_call.1} parent=71 // pred_check_branch
          %577 = sbr.rel (%p575) target = $region76
        $region75: #{tpu_custom_call.1} parent=71 // pred_region
          %578 = dma.done %s571, 128
        $region76: #{tpu_custom_call.1} parent=71 // pred_fallthru
          _
        // Predicated region
        $region77: #{tpu_custom_call.1} parent=71 // pred_check
          %p579 = pneg %p95
        $region78: #{tpu_custom_call.1} parent=71 // pred_check_branch
          %581 = sbr.rel (%p579) target = $region80
        $region79: #{tpu_custom_call.1} parent=71 // pred_region
          %582 = dma.done [#allocation8], 256
        $region80: #{tpu_custom_call.1} parent=71 // pred_fallthru
          _
        // Predicated region
        $region81: #{tpu_custom_call.1} parent=71 // pred_check
          %p583 = pneg %p116
        $region82: #{tpu_custom_call.1} parent=71 // pred_check_branch
          %585 = sbr.rel (%p583) target = $region84
        $region83: #{tpu_custom_call.1} parent=71 // pred_region
          %586 = dma.done [#allocation8], 256
        $region84: #{tpu_custom_call.1} parent=71 // pred_fallthru
          _
        // Predicated region
        $region85: #{tpu_custom_call.1} parent=71 // pred_check
          %p587 = pneg %p137
        $region86: #{tpu_custom_call.1} parent=71 // pred_check_branch
          %589 = sbr.rel (%p587) target = $region88
        $region87: #{tpu_custom_call.1} parent=71 // pred_region
          %590 = dma.done [#allocation11], 256
        $region88: #{tpu_custom_call.1} parent=71 // pred_fallthru
          _
        // Predicated region
        $region89: #{tpu_custom_call.1} parent=71 // pred_check
          %p591 = pneg %p158
        $region90: #{tpu_custom_call.1} parent=71 // pred_check_branch
          %593 = sbr.rel (%p591) target = $region92
        $region91: #{tpu_custom_call.1} parent=71 // pred_region
          %594 = dma.done [#allocation11], 256
        $region92: #{tpu_custom_call.1} parent=71 // pred_fallthru
          _
        // Predicated region
        $region93: #{tpu_custom_call.1} parent=71 // pred_check
          %p595 = pneg %p179
        $region94: #{tpu_custom_call.1} parent=71 // pred_check_branch
          %597 = sbr.rel (%p595) target = $region96
        $region95: #{tpu_custom_call.1} parent=71 // pred_region
          %598 = dma.done [#allocation14], 16
        $region96: #{tpu_custom_call.1} parent=71 // pred_fallthru
          _
        // Predicated region
        $region97: #{tpu_custom_call.1} parent=71 // pred_check
          %p599 = pneg %p200
        $region98: #{tpu_custom_call.1} parent=71 // pred_check_branch
          %601 = sbr.rel (%p599) target = $region100
        $region99: #{tpu_custom_call.1} parent=71 // pred_region
          %602 = dma.done [#allocation14], 16
        $region100: #{tpu_custom_call.1} parent=71 // pred_fallthru
          _
        // Predicated region
        $region101: #{tpu_custom_call.1} parent=71 // pred_check
          %p603 = pneg %p221
        $region102: #{tpu_custom_call.1} parent=71 // pred_check_branch
          %605 = sbr.rel (%p603) target = $region104
        $region103: #{tpu_custom_call.1} parent=71 // pred_region
          %606 = dma.done [#allocation17], 256
        $region104: #{tpu_custom_call.1} parent=71 // pred_fallthru
          _
        // Predicated region
        $region105: #{tpu_custom_call.1} parent=71 // pred_check
          %p607 = pneg %p242
        $region106: #{tpu_custom_call.1} parent=71 // pred_check_branch
          %609 = sbr.rel (%p607) target = $region108
        $region107: #{tpu_custom_call.1} parent=71 // pred_region
          %610 = dma.done [#allocation17], 16
        $region108: #{tpu_custom_call.1} parent=71 // pred_fallthru
          _
        // Predicated region
        $region109: #{tpu_custom_call.1} parent=71 // pred_check
          %p611 = pneg %p263
        $region110: #{tpu_custom_call.1} parent=71 // pred_check_branch
          %613 = sbr.rel (%p611) target = $region112
        $region111: #{tpu_custom_call.1} parent=71 // pred_region
          %614 = dma.done [#allocation20], 512
        $region112: #{tpu_custom_call.1} parent=71 // pred_fallthru
          _
        // Predicated region
        $region113: #{tpu_custom_call.1} parent=71 // pred_check
          %p615 = pneg %p284
        $region114: #{tpu_custom_call.1} parent=71 // pred_check_branch
          %617 = sbr.rel (%p615) target = $region116
        $region115: #{tpu_custom_call.1} parent=71 // pred_region
          %618 = dma.done [#allocation20], 16
        $region116: #{tpu_custom_call.1} parent=71 // pred_fallthru
          _
        // Predicated region
        $region117: #{tpu_custom_call.1} parent=71 // pred_check
          %p619 = pneg %p305
        $region118: #{tpu_custom_call.1} parent=71 // pred_check_branch
          %621 = sbr.rel (%p619) target = $region120
        $region119: #{tpu_custom_call.1} parent=71 // pred_region
          %622 = dma.done [#allocation23], 16
        $region120: #{tpu_custom_call.1} parent=71 // pred_fallthru
          _
        // Predicated region
        $region121: #{tpu_custom_call.1} parent=71 // pred_check
          %p623 = pneg %p326
        $region122: #{tpu_custom_call.1} parent=71 // pred_check_branch
          %625 = sbr.rel (%p623) target = $region124
        $region123: #{tpu_custom_call.1} parent=71 // pred_region
          %626 = dma.done [#allocation23], 16
        $region124: #{tpu_custom_call.1} parent=71 // pred_fallthru
          _
        %s627 = sand.u32 %s61, 1
        %s628 = scalar_lea.sflag [#allocation5], %s627
        %s629 = sand.u32 %s61, 1
        %s630 = smul.addr %s629, 8
        %s631 = scalar_lea.vmem [#allocation4], %s630
        %p632 = pneg %p74
        %p633 = pneg %p71
        %p634 = pneg %p95
        %p635 = pneg %p92
        %p636 = pneg %p116
        %p637 = pneg %p113
        %p638 = pneg %p137
        %p639 = pneg %p134
        %p640 = pneg %p158
        %p641 = pneg %p155
        %p642 = pneg %p179
        %p643 = pneg %p176
        %p644 = pneg %p200
        %p645 = pneg %p197
        %p646 = pneg %p221
        %p647 = pneg %p218
        %p648 = pneg %p242
        %p649 = pneg %p239
        %p650 = pneg %p263
        %p651 = pneg %p260
        %p652 = pneg %p284
        %p653 = pneg %p281
        %p654 = pneg %p305
        %p655 = pneg %p302
        %p656 = pneg %p326
        %p657 = pneg %p323
        %p658 = pneg %p354
        %p659 = pneg %p351
        %s660 = sand.u32 %s341, 1
        %s661 = scalar_lea.sflag [#allocation6], %s660
        %s662 = sand.u32 %s341, 1
        %s663 = smul.addr %s662, 8
        %s664 = scalar_lea.vmem [#allocation25], %s663
        %p665 = pneg %p382
        %p666 = pneg %p379
        %s667 = sand.u32 %s369, 1
        %s668 = scalar_lea.sflag [#allocation27], %s667
        %s669 = sand.u32 %s369, 1
        %s670 = smul.addr %s669, 32
        %s671 = scalar_lea.vmem [#allocation26], %s670
        %p673 = scmp.eq.s32.totalorder %s46, 0
        // Predicated region
        $region125: #{tpu_custom_call.1} parent=71 // pred_check
          %p674 = pneg %p673
        $region126: #{tpu_custom_call.1} parent=71 // pred_check_branch
          %676 = sbr.rel (%p674) target = $region128
        $region127: #{tpu_custom_call.1} parent=71 // pred_region
          %v677 = vld [vmem:[%s574] sm:$0xff]
          %v678 = vpack.c.bf16 %v677, %v677
          %v679 = vld [vmem:[#allocation9] sm:$0xf]
          %v680 = vld [vmem:[#allocation9 + $0x4] sm:$0xf]
          %v681 = vld [vmem:[#allocation9 + $0x8] sm:$0xf]
          %v682 = vld [vmem:[#allocation9 + $0xc] sm:$0xf]
          %v687 = vunpack.c.l.b16 %v679
          %v688 = vunpack.c.l.b16 %v680
          %v689 = vunpack.c.l.b16 %v681
          %v690 = vunpack.c.l.b16 %v682
          %v691 = vpack.c.b16 %v688, %v687
          %v692 = vpack.c.b16 %v690, %v689
          %vm695 = vcmask 261120
          %v697 = vsel %vm695, %v678, 0
          %699 = vmatprep.subr.bf16.mxu0 0
          %700 = vmatpush1.bf16.msra.mxu0 %v691
          %701 = vmatprep.subr.bf16.mxu0 0
          %702 = vmatpush1.bf16.msra.mxu0 %v692
          %703 = vmatprep.subr.bf16.mxu0 0
          %704 = vmatpush1.bf16.msra.mxu0 0
          %705 = vmatprep.subr.bf16.mxu0 0
          %706 = vmatpush1.bf16.msra.mxu0 0
          %707 = vmatprep.subr.bf16.mxu0 0
          %708 = vmatpush1.bf16.msra.mxu0 0
          %709 = vmatprep.subr.bf16.mxu0 0
          %710 = vmatpush1.bf16.msra.mxu0 0
          %711 = vmatprep.subr.bf16.mxu0 0
          %712 = vmatpush1.bf16.msra.mxu0 0
          %713 = vmatprep.subr.bf16.mxu0 0
          %714 = vmatpush1.bf16.msra.mxu0 0
          %715 = vmatprep.subr.bf16.mxu0 0
          %716 = vmatpush1.bf16.msra.mxu0 0
          %717 = vmatprep.subr.bf16.mxu0 0
          %718 = vmatpush1.bf16.msra.mxu0 0
          %719 = vmatprep.subr.bf16.mxu0 0
          %720 = vmatpush1.bf16.msra.mxu0 0
          %721 = vmatprep.subr.bf16.mxu0 0
          %722 = vmatpush1.bf16.msra.mxu0 0
          %723 = vmatprep.subr.bf16.mxu0 0
          %724 = vmatpush1.bf16.msra.mxu0 0
          %725 = vmatprep.subr.bf16.mxu0 0
          %726 = vmatpush1.bf16.msra.mxu0 0
          %727 = vmatprep.subr.bf16.mxu0 0
          %728 = vmatpush1.bf16.msra.mxu0 0
          %729 = vmatprep.subr.bf16.mxu0 0
          %730 = vmatpush1.bf16.msra.mxu0 0
          %731 = vmatprep.mubr.bf16.mxu0 0
          %732 = vmatmul.mubr.bf16.gmra.mrb[0].mxu0 %v697
          %v733 = vpop.f32.mrb[0].mxu0
          %v734 = vadd.f32 0.0, %v733
          %v735 = vpop.f32.mrb[0].mxu0
          %v736 = vpop.f32.mrb[0].mxu0
          %v737 = vpop.f32.mrb[0].mxu0
          %738 = vdwg.mxu0
          %v739 = vpack.c.bf16 %v734, %v734
          %vm740 = vcmask 257024
          %741 = vst.msk [vmem:[#allocation2] sm:$0xf] %vm740, %v739
          %v742 = vld [vmem:[#allocation10] sm:$0xf]
          %v743 = vld [vmem:[#allocation10 + $0x4] sm:$0xf]
          %v744 = vld [vmem:[#allocation10 + $0x8] sm:$0xf]
          %v745 = vld [vmem:[#allocation10 + $0xc] sm:$0xf]
          %v750 = vunpack.c.l.b16 %v742
          %v751 = vunpack.c.l.b16 %v743
          %v752 = vunpack.c.l.b16 %v744
          %v753 = vunpack.c.l.b16 %v745
          %v754 = vpack.c.b16 %v751, %v750
          %v755 = vpack.c.b16 %v753, %v752
          %758 = vmatprep.subr.bf16.mxu0 0
          %759 = vmatpush1.bf16.msra.mxu0 %v754
          %760 = vmatprep.subr.bf16.mxu0 0
          %761 = vmatpush1.bf16.msra.mxu0 %v755
          %762 = vmatprep.subr.bf16.mxu0 0
          %763 = vmatpush1.bf16.msra.mxu0 0
          %764 = vmatprep.subr.bf16.mxu0 0
          %765 = vmatpush1.bf16.msra.mxu0 0
          %766 = vmatprep.subr.bf16.mxu0 0
          %767 = vmatpush1.bf16.msra.mxu0 0
          %768 = vmatprep.subr.bf16.mxu0 0
          %769 = vmatpush1.bf16.msra.mxu0 0
          %770 = vmatprep.subr.bf16.mxu0 0
          %771 = vmatpush1.bf16.msra.mxu0 0
          %772 = vmatprep.subr.bf16.mxu0 0
          %773 = vmatpush1.bf16.msra.mxu0 0
          %774 = vmatprep.subr.bf16.mxu0 0
          %775 = vmatpush1.bf16.msra.mxu0 0
          %776 = vmatprep.subr.bf16.mxu0 0
          %777 = vmatpush1.bf16.msra.mxu0 0
          %778 = vmatprep.subr.bf16.mxu0 0
          %779 = vmatpush1.bf16.msra.mxu0 0
          %780 = vmatprep.subr.bf16.mxu0 0
          %781 = vmatpush1.bf16.msra.mxu0 0
          %782 = vmatprep.subr.bf16.mxu0 0
          %783 = vmatpush1.bf16.msra.mxu0 0
          %784 = vmatprep.subr.bf16.mxu0 0
          %785 = vmatpush1.bf16.msra.mxu0 0
          %786 = vmatprep.subr.bf16.mxu0 0
          %787 = vmatpush1.bf16.msra.mxu0 0
          %788 = vmatprep.subr.bf16.mxu0 0
          %789 = vmatpush1.bf16.msra.mxu0 0
          %790 = vmatprep.mubr.bf16.mxu0 0
          %791 = vmatmul.mubr.bf16.gmra.mrb[0].mxu0 %v697
          %v792 = vpop.f32.mrb[0].mxu0
          %v793 = vadd.f32 0.0, %v792
          %v794 = vpop.f32.mrb[0].mxu0
          %v795 = vpop.f32.mrb[0].mxu0
          %v796 = vpop.f32.mrb[0].mxu0
          %797 = vdwg.mxu0
          %v798 = vpack.c.bf16 %v793, %v793
          %799 = vst.msk [vmem:[#allocation3] sm:$0xf] %vm740, %v798
        $region128: #{tpu_custom_call.1} parent=71 // pred_fallthru
          _
        %s800 = smul.u32 %s46, 8
        %s801 = scalar_lea.vmem %s574, %s800 [#allocation4]
        %v802 = vld [vmem:[%s801] sm:$0xff]
        %v803 = vpack.c.bf16 %v802, %v802
        %v804 = vld [vmem:[#allocation7] sm:$0xf]
        %v805 = vld [vmem:[#allocation7 + $0x4] sm:$0xf]
        %v806 = vld [vmem:[#allocation7 + $0x8] sm:$0xf]
        %v807 = vld [vmem:[#allocation7 + $0xc] sm:$0xf]
        %v812 = vunpack.c.l.b16 %v804
        %v813 = vunpack.c.l.b16 %v805
        %v814 = vunpack.c.l.b16 %v806
        %v815 = vunpack.c.l.b16 %v807
        %v816 = vpack.c.b16 %v813, %v812
        %v817 = vpack.c.b16 %v815, %v814
        %vm820 = vcmask 261120
        %v822 = vsel %vm820, %v803, 0
        %824 = vmatprep.subr.bf16.mxu0 0
        %825 = vmatpush1.bf16.msra.mxu0 %v816
        %826 = vmatprep.subr.bf16.mxu0 0
        %827 = vmatpush1.bf16.msra.mxu0 %v817
        %828 = vmatprep.subr.bf16.mxu0 0
        %829 = vmatpush1.bf16.msra.mxu0 0
        %830 = vmatprep.subr.bf16.mxu0 0
        %831 = vmatpush1.bf16.msra.mxu0 0
        %832 = vmatprep.subr.bf16.mxu0 0
        %833 = vmatpush1.bf16.msra.mxu0 0
        %834 = vmatprep.subr.bf16.mxu0 0
        %835 = vmatpush1.bf16.msra.mxu0 0
        %836 = vmatprep.subr.bf16.mxu0 0
        %837 = vmatpush1.bf16.msra.mxu0 0
        %838 = vmatprep.subr.bf16.mxu0 0
        %839 = vmatpush1.bf16.msra.mxu0 0
        %840 = vmatprep.subr.bf16.mxu0 0
        %841 = vmatpush1.bf16.msra.mxu0 0
        %842 = vmatprep.subr.bf16.mxu0 0
        %843 = vmatpush1.bf16.msra.mxu0 0
        %844 = vmatprep.subr.bf16.mxu0 0
        %845 = vmatpush1.bf16.msra.mxu0 0
        %846 = vmatprep.subr.bf16.mxu0 0
        %847 = vmatpush1.bf16.msra.mxu0 0
        %848 = vmatprep.subr.bf16.mxu0 0
        %849 = vmatpush1.bf16.msra.mxu0 0
        %850 = vmatprep.subr.bf16.mxu0 0
        %851 = vmatpush1.bf16.msra.mxu0 0
        %852 = vmatprep.subr.bf16.mxu0 0
        %853 = vmatpush1.bf16.msra.mxu0 0
        %854 = vmatprep.subr.bf16.mxu0 0
        %855 = vmatpush1.bf16.msra.mxu0 0
        %856 = vmatprep.mubr.bf16.mxu0 0
        %857 = vmatmul.mubr.bf16.gmra.mrb[0].mxu0 %v822
        %v858 = vpop.f32.mrb[0].mxu0
        %v859 = vadd.f32 0.0, %v858
        %v860 = vpop.f32.mrb[0].mxu0
        %v861 = vpop.f32.mrb[0].mxu0
        %v862 = vpop.f32.mrb[0].mxu0
        %863 = vdwg.mxu0
        %v864 = vmul.f32 %v859, 0.35355338
        %v865 = vpack.c.bf16 %v864, %v864
        %v866 = vld [vmem:[#allocation2] sm:$0xf]
        %v867 = vld [vmem:[#allocation3] sm:$0xf]
        %vm868 = vcmask 64512
        %v870 = vsel %vm868, %v865, 0
        %v873 = vsel %vm868, %v866, 0
        %875 = vmatprep.subr.bf16.mxu0 0
        %876 = vmatpush1.bf16.xpose.msra.mxu0 %v873
        %877 = vmatprep.subr.bf16.mxu0 0
        %878 = vmatpush1.bf16.xpose.msra.mxu0 0
        %879 = vmatprep.subr.bf16.mxu0 0
        %880 = vmatpush1.bf16.xpose.msra.mxu0 0
        %881 = vmatprep.subr.bf16.mxu0 0
        %882 = vmatpush1.bf16.xpose.msra.mxu0 0
        %883 = vmatprep.subr.bf16.mxu0 0
        %884 = vmatpush1.bf16.xpose.msra.mxu0 0
        %885 = vmatprep.subr.bf16.mxu0 0
        %886 = vmatpush1.bf16.xpose.msra.mxu0 0
        %887 = vmatprep.subr.bf16.mxu0 0
        %888 = vmatpush1.bf16.xpose.msra.mxu0 0
        %889 = vmatprep.subr.bf16.mxu0 0
        %890 = vmatpush1.bf16.xpose.msra.mxu0 0
        %891 = vmatprep.subr.bf16.mxu0 0
        %892 = vmatpush1.bf16.xpose.msra.mxu0 0
        %893 = vmatprep.subr.bf16.mxu0 0
        %894 = vmatpush1.bf16.xpose.msra.mxu0 0
        %895 = vmatprep.subr.bf16.mxu0 0
        %896 = vmatpush1.bf16.xpose.msra.mxu0 0
        %897 = vmatprep.subr.bf16.mxu0 0
        %898 = vmatpush1.bf16.xpose.msra.mxu0 0
        %899 = vmatprep.subr.bf16.mxu0 0
        %900 = vmatpush1.bf16.xpose.msra.mxu0 0
        %901 = vmatprep.subr.bf16.mxu0 0
        %902 = vmatpush1.bf16.xpose.msra.mxu0 0
        %903 = vmatprep.subr.bf16.mxu0 0
        %904 = vmatpush1.bf16.xpose.msra.mxu0 0
        %905 = vmatprep.subr.bf16.mxu0 0
        %906 = vmatpush1.bf16.xpose.msra.mxu0 0
        %907 = vmatprep.mubr.bf16.mxu0 0
        %908 = vmatmul.mubr.bf16.gmra.mrb[0].mxu0 %v870
        %v909 = vpop.f32.mrb[0].mxu0
        %v910 = vadd.f32 0.0, %v909
        %v911 = vpop.f32.mrb[0].mxu0
        %v912 = vpop.f32.mrb[0].mxu0
        %v913 = vpop.f32.mrb[0].mxu0
        %914 = vdwg.mxu0
        %v915 = vsel %vm868, %v910, -inf
        %916 = vmax.xlane.f32.xlu0 %v915
        %v917 = vpop.xlane.xlu0 %916
        %v918 = vsub.f32 %v910, %v917
        %v919 = vmul.f32 %v918, 1.442695
        %v920 = vpow.pop %v919
        %v921 = vsel %vm868, %v920, 0.0
        %922 = vadd.xlane.f32.xlu0 %v921
        %v923 = vpop.xlane.xlu0 %922
        %v924 = vrcp.pop %v923
        %v925 = vmul.f32 %v920, %v924
        %926 = vst.msk [vmem:[%s671] sm:$0xff] %vm868, %v925
        %v927 = vpack.c.bf16 %v925, %v925
        %v929 = vsel %vm868, %v927, 0
        %vm931 = vcmask 1043456
        %v933 = vsel %vm931, %v867, 0
        %935 = vmatprep.subr.bf16.mxu0 0
        %936 = vmatpush1.bf16.msra.mxu0 %v933
        %937 = vmatprep.subr.bf16.mxu0 0
        %938 = vmatpush1.bf16.msra.mxu0 0
        %939 = vmatprep.subr.bf16.mxu0 0
        %940 = vmatpush1.bf16.msra.mxu0 0
        %941 = vmatprep.subr.bf16.mxu0 0
        %942 = vmatpush1.bf16.msra.mxu0 0
        %943 = vmatprep.subr.bf16.mxu0 0
        %944 = vmatpush1.bf16.msra.mxu0 0
        %945 = vmatprep.subr.bf16.mxu0 0
        %946 = vmatpush1.bf16.msra.mxu0 0
        %947 = vmatprep.subr.bf16.mxu0 0
        %948 = vmatpush1.bf16.msra.mxu0 0
        %949 = vmatprep.subr.bf16.mxu0 0
        %950 = vmatpush1.bf16.msra.mxu0 0
        %951 = vmatprep.subr.bf16.mxu0 0
        %952 = vmatpush1.bf16.msra.mxu0 0
        %953 = vmatprep.subr.bf16.mxu0 0
        %954 = vmatpush1.bf16.msra.mxu0 0
        %955 = vmatprep.subr.bf16.mxu0 0
        %956 = vmatpush1.bf16.msra.mxu0 0
        %957 = vmatprep.subr.bf16.mxu0 0
        %958 = vmatpush1.bf16.msra.mxu0 0
        %959 = vmatprep.subr.bf16.mxu0 0
        %960 = vmatpush1.bf16.msra.mxu0 0
        %961 = vmatprep.subr.bf16.mxu0 0
        %962 = vmatpush1.bf16.msra.mxu0 0
        %963 = vmatprep.subr.bf16.mxu0 0
        %964 = vmatpush1.bf16.msra.mxu0 0
        %965 = vmatprep.subr.bf16.mxu0 0
        %966 = vmatpush1.bf16.msra.mxu0 0
        %967 = vmatprep.mubr.bf16.mxu0 0
        %968 = vmatmul.mubr.bf16.gmra.mrb[0].mxu0 %v929
        %v969 = vpop.f32.mrb[0].mxu0
        %v970 = vadd.f32 0.0, %v969
        %v971 = vpop.f32.mrb[0].mxu0
        %v972 = vpop.f32.mrb[0].mxu0
        %v973 = vpop.f32.mrb[0].mxu0
        %974 = vdwg.mxu0
        %976 = vrot.lane.b32.xlu0 %v865, 120
        %v977 = vpop.permute.xlu0 %976
        %v979 = vunpack.c.l.b16 %v866
        %v980 = vpack.c.b16 %v979, %v979
        %981 = vrot.lane.b32.xlu0 %v980, 120
        %v982 = vpop.permute.xlu0 %981
        %v984 = vsel %vm868, %v977, 0
        %v987 = vsel %vm868, %v982, 0
        %989 = vmatprep.subr.bf16.mxu0 0
        %990 = vmatpush1.bf16.xpose.msra.mxu0 %v987
        %991 = vmatprep.subr.bf16.mxu0 0
        %992 = vmatpush1.bf16.xpose.msra.mxu0 0
        %993 = vmatprep.subr.bf16.mxu0 0
        %994 = vmatpush1.bf16.xpose.msra.mxu0 0
        %995 = vmatprep.subr.bf16.mxu0 0
        %996 = vmatpush1.bf16.xpose.msra.mxu0 0
        %997 = vmatprep.subr.bf16.mxu0 0
        %998 = vmatpush1.bf16.xpose.msra.mxu0 0
        %999 = vmatprep.subr.bf16.mxu0 0
        %1000 = vmatpush1.bf16.xpose.msra.mxu0 0
        %1001 = vmatprep.subr.bf16.mxu0 0
        %1002 = vmatpush1.bf16.xpose.msra.mxu0 0
        %1003 = vmatprep.subr.bf16.mxu0 0
        %1004 = vmatpush1.bf16.xpose.msra.mxu0 0
        %1005 = vmatprep.subr.bf16.mxu0 0
        %1006 = vmatpush1.bf16.xpose.msra.mxu0 0
        %1007 = vmatprep.subr.bf16.mxu0 0
        %1008 = vmatpush1.bf16.xpose.msra.mxu0 0
        %1009 = vmatprep.subr.bf16.mxu0 0
        %1010 = vmatpush1.bf16.xpose.msra.mxu0 0
        %1011 = vmatprep.subr.bf16.mxu0 0
        %1012 = vmatpush1.bf16.xpose.msra.mxu0 0
        %1013 = vmatprep.subr.bf16.mxu0 0
        %1014 = vmatpush1.bf16.xpose.msra.mxu0 0
        %1015 = vmatprep.subr.bf16.mxu0 0
        %1016 = vmatpush1.bf16.xpose.msra.mxu0 0
        %1017 = vmatprep.subr.bf16.mxu0 0
        %1018 = vmatpush1.bf16.xpose.msra.mxu0 0
        %1019 = vmatprep.subr.bf16.mxu0 0
        %1020 = vmatpush1.bf16.xpose.msra.mxu0 0
        %1021 = vmatprep.mubr.bf16.mxu0 0
        %1022 = vmatmul.mubr.bf16.gmra.mrb[0].mxu0 %v984
        %v1023 = vpop.f32.mrb[0].mxu0
        %v1024 = vadd.f32 0.0, %v1023
        %v1025 = vpop.f32.mrb[0].mxu0
        %v1026 = vpop.f32.mrb[0].mxu0
        %v1027 = vpop.f32.mrb[0].mxu0
        %1028 = vdwg.mxu0
        %v1029 = vsel %vm868, %v1024, -inf
        %1030 = vmax.xlane.f32.xlu0 %v1029
        %v1031 = vpop.xlane.xlu0 %1030
        %v1032 = vsub.f32 %v1024, %v1031
        %v1033 = vmul.f32 %v1032, 1.442695
        %v1034 = vpow.pop %v1033
        %v1035 = vsel %vm868, %v1034, 0.0
        %1036 = vadd.xlane.f32.xlu0 %v1035
        %v1037 = vpop.xlane.xlu0 %1036
        %v1038 = vrcp.pop %v1037
        %v1039 = vmul.f32 %v1034, %v1038
        %s1040 = scalar_lea.vmem %s671, 8 [#allocation26]
        %1041 = vst.msk [vmem:[%s1040] sm:$0xff] %vm868, %v1039
        %v1042 = vpack.c.bf16 %v1039, %v1039
        %v1044 = vunpack.c.l.b16 %v867
        %v1045 = vpack.c.b16 %v1044, %v1044
        %1046 = vrot.lane.b32.xlu0 %v1045, 120
        %v1047 = vpop.permute.xlu0 %1046
        %v1049 = vsel %vm868, %v1042, 0
        %v1052 = vsel %vm931, %v1047, 0
        %1054 = vmatprep.subr.bf16.mxu0 0
        %1055 = vmatpush1.bf16.msra.mxu0 %v1052
        %1056 = vmatprep.subr.bf16.mxu0 0
        %1057 = vmatpush1.bf16.msra.mxu0 0
        %1058 = vmatprep.subr.bf16.mxu0 0
        %1059 = vmatpush1.bf16.msra.mxu0 0
        %1060 = vmatprep.subr.bf16.mxu0 0
        %1061 = vmatpush1.bf16.msra.mxu0 0
        %1062 = vmatprep.subr.bf16.mxu0 0
        %1063 = vmatpush1.bf16.msra.mxu0 0
        %1064 = vmatprep.subr.bf16.mxu0 0
        %1065 = vmatpush1.bf16.msra.mxu0 0
        %1066 = vmatprep.subr.bf16.mxu0 0
        %1067 = vmatpush1.bf16.msra.mxu0 0
        %1068 = vmatprep.subr.bf16.mxu0 0
        %1069 = vmatpush1.bf16.msra.mxu0 0
        %1070 = vmatprep.subr.bf16.mxu0 0
        %1071 = vmatpush1.bf16.msra.mxu0 0
        %1072 = vmatprep.subr.bf16.mxu0 0
        %1073 = vmatpush1.bf16.msra.mxu0 0
        %1074 = vmatprep.subr.bf16.mxu0 0
        %1075 = vmatpush1.bf16.msra.mxu0 0
        %1076 = vmatprep.subr.bf16.mxu0 0
        %1077 = vmatpush1.bf16.msra.mxu0 0
        %1078 = vmatprep.subr.bf16.mxu0 0
        %1079 = vmatpush1.bf16.msra.mxu0 0
        %1080 = vmatprep.subr.bf16.mxu0 0
        %1081 = vmatpush1.bf16.msra.mxu0 0
        %1082 = vmatprep.subr.bf16.mxu0 0
        %1083 = vmatpush1.bf16.msra.mxu0 0
        %1084 = vmatprep.subr.bf16.mxu0 0
        %1085 = vmatpush1.bf16.msra.mxu0 0
        %1086 = vmatprep.mubr.bf16.mxu0 0
        %1087 = vmatmul.mubr.bf16.gmra.mrb[0].mxu0 %v1049
        %v1088 = vpop.f32.mrb[0].mxu0
        %v1089 = vadd.f32 0.0, %v1088
        %v1090 = vpop.f32.mrb[0].mxu0
        %v1091 = vpop.f32.mrb[0].mxu0
        %v1092 = vpop.f32.mrb[0].mxu0
        %1093 = vdwg.mxu0
        %1094 = vrot.lane.b32.xlu0 %v865, 112
        %v1095 = vpop.permute.xlu0 %1094
        %1096 = vrot.lane.b32.xlu0 %v980, 112
        %v1097 = vpop.permute.xlu0 %1096
        %v1099 = vsel %vm868, %v1095, 0
        %v1102 = vsel %vm868, %v1097, 0
        %1104 = vmatprep.subr.bf16.mxu0 0
        %1105 = vmatpush1.bf16.xpose.msra.mxu0 %v1102
        %1106 = vmatprep.subr.bf16.mxu0 0
        %1107 = vmatpush1.bf16.xpose.msra.mxu0 0
        %1108 = vmatprep.subr.bf16.mxu0 0
        %1109 = vmatpush1.bf16.xpose.msra.mxu0 0
        %1110 = vmatprep.subr.bf16.mxu0 0
        %1111 = vmatpush1.bf16.xpose.msra.mxu0 0
        %1112 = vmatprep.subr.bf16.mxu0 0
        %1113 = vmatpush1.bf16.xpose.msra.mxu0 0
        %1114 = vmatprep.subr.bf16.mxu0 0
        %1115 = vmatpush1.bf16.xpose.msra.mxu0 0
        %1116 = vmatprep.subr.bf16.mxu0 0
        %1117 = vmatpush1.bf16.xpose.msra.mxu0 0
        %1118 = vmatprep.subr.bf16.mxu0 0
        %1119 = vmatpush1.bf16.xpose.msra.mxu0 0
        %1120 = vmatprep.subr.bf16.mxu0 0
        %1121 = vmatpush1.bf16.xpose.msra.mxu0 0
        %1122 = vmatprep.subr.bf16.mxu0 0
        %1123 = vmatpush1.bf16.xpose.msra.mxu0 0
        %1124 = vmatprep.subr.bf16.mxu0 0
        %1125 = vmatpush1.bf16.xpose.msra.mxu0 0
        %1126 = vmatprep.subr.bf16.mxu0 0
        %1127 = vmatpush1.bf16.xpose.msra.mxu0 0
        %1128 = vmatprep.subr.bf16.mxu0 0
        %1129 = vmatpush1.bf16.xpose.msra.mxu0 0
        %1130 = vmatprep.subr.bf16.mxu0 0
        %1131 = vmatpush1.bf16.xpose.msra.mxu0 0
        %1132 = vmatprep.subr.bf16.mxu0 0
        %1133 = vmatpush1.bf16.xpose.msra.mxu0 0
        %1134 = vmatprep.subr.bf16.mxu0 0
        %1135 = vmatpush1.bf16.xpose.msra.mxu0 0
        %1136 = vmatprep.mubr.bf16.mxu0 0
        %1137 = vmatmul.mubr.bf16.gmra.mrb[0].mxu0 %v1099
        %v1138 = vpop.f32.mrb[0].mxu0
        %v1139 = vadd.f32 0.0, %v1138
        %v1140 = vpop.f32.mrb[0].mxu0
        %v1141 = vpop.f32.mrb[0].mxu0
        %v1142 = vpop.f32.mrb[0].mxu0
        %1143 = vdwg.mxu0
        %v1144 = vsel %vm868, %v1139, -inf
        %1145 = vmax.xlane.f32.xlu0 %v1144
        %v1146 = vpop.xlane.xlu0 %1145
        %v1147 = vsub.f32 %v1139, %v1146
        %v1148 = vmul.f32 %v1147, 1.442695
        %v1149 = vpow.pop %v1148
        %v1150 = vsel %vm868, %v1149, 0.0
        %1151 = vadd.xlane.f32.xlu0 %v1150
        %v1152 = vpop.xlane.xlu0 %1151
        %v1153 = vrcp.pop %v1152
        %v1154 = vmul.f32 %v1149, %v1153
        %s1155 = scalar_lea.vmem %s671, 16 [#allocation26]
        %1156 = vst.msk [vmem:[%s1155] sm:$0xff] %vm868, %v1154
        %v1157 = vpack.c.bf16 %v1154, %v1154
        %1158 = vrot.lane.b32.xlu0 %v1045, 112
        %v1159 = vpop.permute.xlu0 %1158
        %v1161 = vsel %vm868, %v1157, 0
        %v1164 = vsel %vm931, %v1159, 0
        %1166 = vmatprep.subr.bf16.mxu0 0
        %1167 = vmatpush1.bf16.msra.mxu0 %v1164
        %1168 = vmatprep.subr.bf16.mxu0 0
        %1169 = vmatpush1.bf16.msra.mxu0 0
        %1170 = vmatprep.subr.bf16.mxu0 0
        %1171 = vmatpush1.bf16.msra.mxu0 0
        %1172 = vmatprep.subr.bf16.mxu0 0
        %1173 = vmatpush1.bf16.msra.mxu0 0
        %1174 = vmatprep.subr.bf16.mxu0 0
        %1175 = vmatpush1.bf16.msra.mxu0 0
        %1176 = vmatprep.subr.bf16.mxu0 0
        %1177 = vmatpush1.bf16.msra.mxu0 0
        %1178 = vmatprep.subr.bf16.mxu0 0
        %1179 = vmatpush1.bf16.msra.mxu0 0
        %1180 = vmatprep.subr.bf16.mxu0 0
        %1181 = vmatpush1.bf16.msra.mxu0 0
        %1182 = vmatprep.subr.bf16.mxu0 0
        %1183 = vmatpush1.bf16.msra.mxu0 0
        %1184 = vmatprep.subr.bf16.mxu0 0
        %1185 = vmatpush1.bf16.msra.mxu0 0
        %1186 = vmatprep.subr.bf16.mxu0 0
        %1187 = vmatpush1.bf16.msra.mxu0 0
        %1188 = vmatprep.subr.bf16.mxu0 0
        %1189 = vmatpush1.bf16.msra.mxu0 0
        %1190 = vmatprep.subr.bf16.mxu0 0
        %1191 = vmatpush1.bf16.msra.mxu0 0
        %1192 = vmatprep.subr.bf16.mxu0 0
        %1193 = vmatpush1.bf16.msra.mxu0 0
        %1194 = vmatprep.subr.bf16.mxu0 0
        %1195 = vmatpush1.bf16.msra.mxu0 0
        %1196 = vmatprep.subr.bf16.mxu0 0
        %1197 = vmatpush1.bf16.msra.mxu0 0
        %1198 = vmatprep.mubr.bf16.mxu0 0
        %1199 = vmatmul.mubr.bf16.gmra.mrb[0].mxu0 %v1161
        %v1200 = vpop.f32.mrb[0].mxu0
        %v1201 = vadd.f32 0.0, %v1200
        %v1202 = vpop.f32.mrb[0].mxu0
        %v1203 = vpop.f32.mrb[0].mxu0
        %v1204 = vpop.f32.mrb[0].mxu0
        %1205 = vdwg.mxu0
        %1206 = vrot.lane.b32.xlu0 %v865, 104
        %v1207 = vpop.permute.xlu0 %1206
        %1208 = vrot.lane.b32.xlu0 %v980, 104
        %v1209 = vpop.permute.xlu0 %1208
        %v1211 = vsel %vm868, %v1207, 0
        %v1214 = vsel %vm868, %v1209, 0
        %1216 = vmatprep.subr.bf16.mxu0 0
        %1217 = vmatpush1.bf16.xpose.msra.mxu0 %v1214
        %1218 = vmatprep.subr.bf16.mxu0 0
        %1219 = vmatpush1.bf16.xpose.msra.mxu0 0
        %1220 = vmatprep.subr.bf16.mxu0 0
        %1221 = vmatpush1.bf16.xpose.msra.mxu0 0
        %1222 = vmatprep.subr.bf16.mxu0 0
        %1223 = vmatpush1.bf16.xpose.msra.mxu0 0
        %1224 = vmatprep.subr.bf16.mxu0 0
        %1225 = vmatpush1.bf16.xpose.msra.mxu0 0
        %1226 = vmatprep.subr.bf16.mxu0 0
        %1227 = vmatpush1.bf16.xpose.msra.mxu0 0
        %1228 = vmatprep.subr.bf16.mxu0 0
        %1229 = vmatpush1.bf16.xpose.msra.mxu0 0
        %1230 = vmatprep.subr.bf16.mxu0 0
        %1231 = vmatpush1.bf16.xpose.msra.mxu0 0
        %1232 = vmatprep.subr.bf16.mxu0 0
        %1233 = vmatpush1.bf16.xpose.msra.mxu0 0
        %1234 = vmatprep.subr.bf16.mxu0 0
        %1235 = vmatpush1.bf16.xpose.msra.mxu0 0
        %1236 = vmatprep.subr.bf16.mxu0 0
        %1237 = vmatpush1.bf16.xpose.msra.mxu0 0
        %1238 = vmatprep.subr.bf16.mxu0 0
        %1239 = vmatpush1.bf16.xpose.msra.mxu0 0
        %1240 = vmatprep.subr.bf16.mxu0 0
        %1241 = vmatpush1.bf16.xpose.msra.mxu0 0
        %1242 = vmatprep.subr.bf16.mxu0 0
        %1243 = vmatpush1.bf16.xpose.msra.mxu0 0
        %1244 = vmatprep.subr.bf16.mxu0 0
        %1245 = vmatpush1.bf16.xpose.msra.mxu0 0
        %1246 = vmatprep.subr.bf16.mxu0 0
        %1247 = vmatpush1.bf16.xpose.msra.mxu0 0
        %1248 = vmatprep.mubr.bf16.mxu0 0
        %1249 = vmatmul.mubr.bf16.gmra.mrb[0].mxu0 %v1211
        %v1250 = vpop.f32.mrb[0].mxu0
        %v1251 = vadd.f32 0.0, %v1250
        %v1252 = vpop.f32.mrb[0].mxu0
        %v1253 = vpop.f32.mrb[0].mxu0
        %v1254 = vpop.f32.mrb[0].mxu0
        %1255 = vdwg.mxu0
        %v1256 = vsel %vm868, %v1251, -inf
        %1257 = vmax.xlane.f32.xlu0 %v1256
        %v1258 = vpop.xlane.xlu0 %1257
        %v1259 = vsub.f32 %v1251, %v1258
        %v1260 = vmul.f32 %v1259, 1.442695
        %v1261 = vpow.pop %v1260
        %v1262 = vsel %vm868, %v1261, 0.0
        %1263 = vadd.xlane.f32.xlu0 %v1262
        %v1264 = vpop.xlane.xlu0 %1263
        %v1265 = vrcp.pop %v1264
        %v1266 = vmul.f32 %v1261, %v1265
        %s1267 = scalar_lea.vmem %s671, 24 [#allocation26]
        %1268 = vst.msk [vmem:[%s1267] sm:$0xff] %vm868, %v1266
        %v1269 = vpack.c.bf16 %v1266, %v1266
        %1270 = vrot.lane.b32.xlu0 %v1045, 104
        %v1271 = vpop.permute.xlu0 %1270
        %v1273 = vsel %vm868, %v1269, 0
        %v1276 = vsel %vm931, %v1271, 0
        %1278 = vmatprep.subr.bf16.mxu0 0
        %1279 = vmatpush1.bf16.msra.mxu0 %v1276
        %1280 = vmatprep.subr.bf16.mxu0 0
        %1281 = vmatpush1.bf16.msra.mxu0 0
        %1282 = vmatprep.subr.bf16.mxu0 0
        %1283 = vmatpush1.bf16.msra.mxu0 0
        %1284 = vmatprep.subr.bf16.mxu0 0
        %1285 = vmatpush1.bf16.msra.mxu0 0
        %1286 = vmatprep.subr.bf16.mxu0 0
        %1287 = vmatpush1.bf16.msra.mxu0 0
        %1288 = vmatprep.subr.bf16.mxu0 0
        %1289 = vmatpush1.bf16.msra.mxu0 0
        %1290 = vmatprep.subr.bf16.mxu0 0
        %1291 = vmatpush1.bf16.msra.mxu0 0
        %1292 = vmatprep.subr.bf16.mxu0 0
        %1293 = vmatpush1.bf16.msra.mxu0 0
        %1294 = vmatprep.subr.bf16.mxu0 0
        %1295 = vmatpush1.bf16.msra.mxu0 0
        %1296 = vmatprep.subr.bf16.mxu0 0
        %1297 = vmatpush1.bf16.msra.mxu0 0
        %1298 = vmatprep.subr.bf16.mxu0 0
        %1299 = vmatpush1.bf16.msra.mxu0 0
        %1300 = vmatprep.subr.bf16.mxu0 0
        %1301 = vmatpush1.bf16.msra.mxu0 0
        %1302 = vmatprep.subr.bf16.mxu0 0
        %1303 = vmatpush1.bf16.msra.mxu0 0
        %1304 = vmatprep.subr.bf16.mxu0 0
        %1305 = vmatpush1.bf16.msra.mxu0 0
        %1306 = vmatprep.subr.bf16.mxu0 0
        %1307 = vmatpush1.bf16.msra.mxu0 0
        %1308 = vmatprep.subr.bf16.mxu0 0
        %1309 = vmatpush1.bf16.msra.mxu0 0
        %1310 = vmatprep.mubr.bf16.mxu0 0
        %1311 = vmatmul.mubr.bf16.gmra.mrb[0].mxu0 %v1273
        %v1312 = vpop.f32.mrb[0].mxu0
        %v1313 = vadd.f32 0.0, %v1312
        %v1314 = vpop.f32.mrb[0].mxu0
        %v1315 = vpop.f32.mrb[0].mxu0
        %v1316 = vpop.f32.mrb[0].mxu0
        %1317 = vdwg.mxu0
        %1319 = vrot.lane.b32.xlu0 %v1089, 8
        %v1320 = vpop.permute.xlu0 %1319
        %1323 = vrot.lane.b32.xlu0 %v1201, 16
        %v1324 = vpop.permute.xlu0 %1323
        %1327 = vrot.lane.b32.xlu0 %v1313, 24
        %v1328 = vpop.permute.xlu0 %1327
        %v1330 = vsel %vm868, %v970, %v1320
        %vm1331 = vcmask 130048
        %v1332 = vsel %vm1331, %v1330, %v1324
        %vm1333 = vcmask 195584
        %v1334 = vsel %vm1333, %v1332, %v1328
        %v1335 = vpack.c.bf16 %v1334, %v1334
        %v1336 = vld [vmem:[#allocation12] sm:$0xf]
        %v1337 = vld [vmem:[#allocation12 + $0x4] sm:$0xf]
        %v1338 = vld [vmem:[#allocation12 + $0x8] sm:$0xf]
        %v1339 = vld [vmem:[#allocation12 + $0xc] sm:$0xf]
        %v1344 = vunpack.c.l.b16 %v1336
        %v1345 = vunpack.c.l.b16 %v1337
        %v1346 = vunpack.c.l.b16 %v1338
        %v1347 = vunpack.c.l.b16 %v1339
        %v1348 = vpack.c.b16 %v1345, %v1344
        %v1349 = vpack.c.b16 %v1347, %v1346
        %v1353 = vsel %vm820, %v1335, 0
        %1355 = vmatprep.subr.bf16.mxu0 0
        %1356 = vmatpush1.bf16.msra.mxu0 %v1348
        %1357 = vmatprep.subr.bf16.mxu0 0
        %1358 = vmatpush1.bf16.msra.mxu0 %v1349
        %1359 = vmatprep.subr.bf16.mxu0 0
        %1360 = vmatpush1.bf16.msra.mxu0 0
        %1361 = vmatprep.subr.bf16.mxu0 0
        %1362 = vmatpush1.bf16.msra.mxu0 0
        %1363 = vmatprep.subr.bf16.mxu0 0
        %1364 = vmatpush1.bf16.msra.mxu0 0
        %1365 = vmatprep.subr.bf16.mxu0 0
        %1366 = vmatpush1.bf16.msra.mxu0 0
        %1367 = vmatprep.subr.bf16.mxu0 0
        %1368 = vmatpush1.bf16.msra.mxu0 0
        %1369 = vmatprep.subr.bf16.mxu0 0
        %1370 = vmatpush1.bf16.msra.mxu0 0
        %1371 = vmatprep.subr.bf16.mxu0 0
        %1372 = vmatpush1.bf16.msra.mxu0 0
        %1373 = vmatprep.subr.bf16.mxu0 0
        %1374 = vmatpush1.bf16.msra.mxu0 0
        %1375 = vmatprep.subr.bf16.mxu0 0
        %1376 = vmatpush1.bf16.msra.mxu0 0
        %1377 = vmatprep.subr.bf16.mxu0 0
        %1378 = vmatpush1.bf16.msra.mxu0 0
        %1379 = vmatprep.subr.bf16.mxu0 0
        %1380 = vmatpush1.bf16.msra.mxu0 0
        %1381 = vmatprep.subr.bf16.mxu0 0
        %1382 = vmatpush1.bf16.msra.mxu0 0
        %1383 = vmatprep.subr.bf16.mxu0 0
        %1384 = vmatpush1.bf16.msra.mxu0 0
        %1385 = vmatprep.subr.bf16.mxu0 0
        %1386 = vmatpush1.bf16.msra.mxu0 0
        %1387 = vmatprep.mubr.bf16.mxu0 0
        %1388 = vmatmul.mubr.bf16.gmra.mrb[0].mxu0 %v1353
        %v1389 = vpop.f32.mrb[0].mxu0
        %v1390 = vadd.f32 %v802, %v1389
        %v1391 = vpop.f32.mrb[0].mxu0
        %v1392 = vpop.f32.mrb[0].mxu0
        %v1393 = vpop.f32.mrb[0].mxu0
        %1394 = vdwg.mxu0
        %v1395 = vsel %vm820, %v1390, 0.0
        %1396 = vadd.xlane.f32.xlu0 %v1395
        %v1397 = vpop.xlane.xlu0 %1396
        %v1398 = vrcp.pop 32.0
        %v1399 = vmul.f32 %v1397, %v1398
        %v1400 = vsub.f32 %v1390, %v1399
        %v1401 = vmul.f32 %v1400, %v1400
        %v1402 = vsel %vm820, %v1401, 0.0
        %1403 = vadd.xlane.f32.xlu0 %v1402
        %v1404 = vpop.xlane.xlu0 %1403
        %v1405 = vmul.f32 %v1404, %v1398
        %v1406 = vadd.f32 %v1405, 1e-06
        %v1407 = vrsqrt.pop %v1406
        %v1408 = vmul.f32 %v1400, %v1407
        %v1409 = vld [vmem:[#allocation13] sm:$0x1]
        %v1411 = vlaneseq
        %v1412 = vshrl.u32 %v1411, 7
        %v1413 = vsub.s32 0, %v1412
        %v1414 = vrot.slane %v1409, %v1413
        %v1416 = vmul.f32 %v1408, %v1414
        %v1417 = vld [vmem:[#allocation15] sm:$0x1]
        %v1419 = vlaneseq
        %v1420 = vshrl.u32 %v1419, 7
        %v1421 = vsub.s32 0, %v1420
        %v1422 = vrot.slane %v1417, %v1421
        %v1424 = vadd.f32 %v1416, %v1422
        %v1425 = vpack.c.bf16 %v1424, %v1424
        %v1426 = vld [vmem:[#allocation16] sm:$0xf]
        %v1427 = vld [vmem:[#allocation16 + $0x4] sm:$0xf]
        %v1428 = vld [vmem:[#allocation16 + $0x8] sm:$0xf]
        %v1429 = vld [vmem:[#allocation16 + $0xc] sm:$0xf]
        %v1430 = vld [vmem:[#allocation18] sm:$0x1]
        %v1432 = vlaneseq
        %v1433 = vshrl.u32 %v1432, 7
        %v1434 = vsub.s32 0, %v1433
        %v1435 = vrot.slane %v1430, %v1434
        %v1441 = vunpack.c.l.b16 %v1426
        %v1442 = vunpack.c.l.b16 %v1427
        %v1443 = vunpack.c.l.b16 %v1428
        %v1444 = vunpack.c.l.b16 %v1429
        %v1445 = vpack.c.b16 %v1442, %v1441
        %v1446 = vpack.c.b16 %v1444, %v1443
        %v1450 = vsel %vm820, %v1425, 0
        %1452 = vmatprep.subr.bf16.mxu0 0
        %1453 = vmatpush1.bf16.msra.mxu0 %v1445
        %1454 = vmatprep.subr.bf16.mxu0 0
        %1455 = vmatpush1.bf16.msra.mxu0 %v1446
        %1456 = vmatprep.subr.bf16.mxu0 0
        %1457 = vmatpush1.bf16.msra.mxu0 0
        %1458 = vmatprep.subr.bf16.mxu0 0
        %1459 = vmatpush1.bf16.msra.mxu0 0
        %1460 = vmatprep.subr.bf16.mxu0 0
        %1461 = vmatpush1.bf16.msra.mxu0 0
        %1462 = vmatprep.subr.bf16.mxu0 0
        %1463 = vmatpush1.bf16.msra.mxu0 0
        %1464 = vmatprep.subr.bf16.mxu0 0
        %1465 = vmatpush1.bf16.msra.mxu0 0
        %1466 = vmatprep.subr.bf16.mxu0 0
        %1467 = vmatpush1.bf16.msra.mxu0 0
        %1468 = vmatprep.subr.bf16.mxu0 0
        %1469 = vmatpush1.bf16.msra.mxu0 0
        %1470 = vmatprep.subr.bf16.mxu0 0
        %1471 = vmatpush1.bf16.msra.mxu0 0
        %1472 = vmatprep.subr.bf16.mxu0 0
        %1473 = vmatpush1.bf16.msra.mxu0 0
        %1474 = vmatprep.subr.bf16.mxu0 0
        %1475 = vmatpush1.bf16.msra.mxu0 0
        %1476 = vmatprep.subr.bf16.mxu0 0
        %1477 = vmatpush1.bf16.msra.mxu0 0
        %1478 = vmatprep.subr.bf16.mxu0 0
        %1479 = vmatpush1.bf16.msra.mxu0 0
        %1480 = vmatprep.subr.bf16.mxu0 0
        %1481 = vmatpush1.bf16.msra.mxu0 0
        %1482 = vmatprep.subr.bf16.mxu0 0
        %1483 = vmatpush1.bf16.msra.mxu0 0
        %1484 = vmatprep.mubr.bf16.mxu0 0
        %1485 = vmatmul.mubr.bf16.gmra.mrb[0].mxu0 %v1450
        %v1486 = vpop.f32.mrb[0].mxu0
        %v1487 = vadd.f32 %v1435, %v1486
        %v1488 = vpop.f32.mrb[0].mxu0
        %v1489 = vpop.f32.mrb[0].mxu0
        %v1490 = vpop.f32.mrb[0].mxu0
        %1491 = vdwg.mxu0
        %v1492 = vmax.f32 %v1487, 0.0
        %v1493 = vpack.c.bf16 %v1492, %v1492
        %v1494 = vld [vmem:[#allocation19] sm:$0xf]
        %v1495 = vld [vmem:[#allocation19 + $0x4] sm:$0xf]
        %v1496 = vld [vmem:[#allocation19 + $0x8] sm:$0xf]
        %v1497 = vld [vmem:[#allocation19 + $0xc] sm:$0xf]
        %v1498 = vld [vmem:[#allocation19 + $0x10] sm:$0xf]
        %v1499 = vld [vmem:[#allocation19 + $0x14] sm:$0xf]
        %v1500 = vld [vmem:[#allocation19 + $0x18] sm:$0xf]
        %v1501 = vld [vmem:[#allocation19 + $0x1c] sm:$0xf]
        %v1502 = vld [vmem:[#allocation21] sm:$0x1]
        %v1504 = vlaneseq
        %v1505 = vshrl.u32 %v1504, 7
        %v1506 = vsub.s32 0, %v1505
        %v1507 = vrot.slane %v1502, %v1506
        %v1517 = vunpack.c.l.b16 %v1494
        %v1518 = vunpack.c.l.b16 %v1495
        %v1519 = vunpack.c.l.b16 %v1496
        %v1520 = vunpack.c.l.b16 %v1497
        %v1521 = vunpack.c.l.b16 %v1498
        %v1522 = vunpack.c.l.b16 %v1499
        %v1523 = vunpack.c.l.b16 %v1500
        %v1524 = vunpack.c.l.b16 %v1501
        %v1525 = vpack.c.b16 %v1518, %v1517
        %v1526 = vpack.c.b16 %v1520, %v1519
        %v1527 = vpack.c.b16 %v1522, %v1521
        %v1528 = vpack.c.b16 %v1524, %v1523
        %vm1533 = vcmask 523264
        %v1535 = vsel %vm1533, %v1493, 0
        %1537 = vmatprep.subr.bf16.mxu0 0
        %1538 = vmatpush1.bf16.msra.mxu0 %v1525
        %1539 = vmatprep.subr.bf16.mxu0 0
        %1540 = vmatpush1.bf16.msra.mxu0 %v1526
        %1541 = vmatprep.subr.bf16.mxu0 0
        %1542 = vmatpush1.bf16.msra.mxu0 %v1527
        %1543 = vmatprep.subr.bf16.mxu0 0
        %1544 = vmatpush1.bf16.msra.mxu0 %v1528
        %1545 = vmatprep.subr.bf16.mxu0 0
        %1546 = vmatpush1.bf16.msra.mxu0 0
        %1547 = vmatprep.subr.bf16.mxu0 0
        %1548 = vmatpush1.bf16.msra.mxu0 0
        %1549 = vmatprep.subr.bf16.mxu0 0
        %1550 = vmatpush1.bf16.msra.mxu0 0
        %1551 = vmatprep.subr.bf16.mxu0 0
        %1552 = vmatpush1.bf16.msra.mxu0 0
        %1553 = vmatprep.subr.bf16.mxu0 0
        %1554 = vmatpush1.bf16.msra.mxu0 0
        %1555 = vmatprep.subr.bf16.mxu0 0
        %1556 = vmatpush1.bf16.msra.mxu0 0
        %1557 = vmatprep.subr.bf16.mxu0 0
        %1558 = vmatpush1.bf16.msra.mxu0 0
        %1559 = vmatprep.subr.bf16.mxu0 0
        %1560 = vmatpush1.bf16.msra.mxu0 0
        %1561 = vmatprep.subr.bf16.mxu0 0
        %1562 = vmatpush1.bf16.msra.mxu0 0
        %1563 = vmatprep.subr.bf16.mxu0 0
        %1564 = vmatpush1.bf16.msra.mxu0 0
        %1565 = vmatprep.subr.bf16.mxu0 0
        %1566 = vmatpush1.bf16.msra.mxu0 0
        %1567 = vmatprep.subr.bf16.mxu0 0
        %1568 = vmatpush1.bf16.msra.mxu0 0
        %1569 = vmatprep.mubr.bf16.mxu0 0
        %1570 = vmatmul.mubr.bf16.gmra.mrb[0].mxu0 %v1535
        %v1571 = vpop.f32.mrb[0].mxu0
        %v1572 = vadd.f32 %v1507, %v1571
        %v1573 = vpop.f32.mrb[0].mxu0
        %v1574 = vpop.f32.mrb[0].mxu0
        %v1575 = vpop.f32.mrb[0].mxu0
        %1576 = vdwg.mxu0
        %v1577 = vadd.f32 %v1572, %v1424
        %v1578 = vsel %vm820, %v1577, 0.0
        %1579 = vadd.xlane.f32.xlu0 %v1578
        %v1580 = vpop.xlane.xlu0 %1579
        %v1581 = vmul.f32 %v1580, %v1398
        %v1582 = vsub.f32 %v1577, %v1581
        %v1583 = vmul.f32 %v1582, %v1582
        %v1584 = vsel %vm820, %v1583, 0.0
        %1585 = vadd.xlane.f32.xlu0 %v1584
        %v1586 = vpop.xlane.xlu0 %1585
        %v1587 = vmul.f32 %v1586, %v1398
        %v1588 = vadd.f32 %v1587, 1e-06
        %v1589 = vrsqrt.pop %v1588
        %v1590 = vmul.f32 %v1582, %v1589
        %v1591 = vld [vmem:[#allocation22] sm:$0x1]
        %v1593 = vlaneseq
        %v1594 = vshrl.u32 %v1593, 7
        %v1595 = vsub.s32 0, %v1594
        %v1596 = vrot.slane %v1591, %v1595
        %v1598 = vmul.f32 %v1590, %v1596
        %v1599 = vld [vmem:[#allocation24] sm:$0x1]
        %v1601 = vlaneseq
        %v1602 = vshrl.u32 %v1601, 7
        %v1603 = vsub.s32 0, %v1602
        %v1604 = vrot.slane %v1599, %v1603
        %v1606 = vadd.f32 %v1598, %v1604
        %1607 = vst.msk [vmem:[%s664] sm:$0xff] %vm820, %v1606
        %s1608 = sand.u32 %s341, 1
        %s1609 = scalar_lea.sflag [#allocation6], %s1608
        %s1610 = sand.u32 %s341, 1
        %s1611 = smul.addr %s1610, 8
        %s1612 = scalar_lea.vmem [#allocation25], %s1611
        %s1613 = sand.u32 %s369, 1
        %s1614 = scalar_lea.sflag [#allocation27], %s1613
        %s1615 = sand.u32 %s369, 1
        %s1616 = smul.addr %s1615, 32
        %s1617 = scalar_lea.vmem [#allocation26], %s1616
        // Predicated region
        $region129: #{tpu_custom_call.1} parent=71 // pred_check
          %p1618 = pneg %p351
        $region130: #{tpu_custom_call.1} parent=71 // pred_check_branch
          %1620 = sbr.rel (%p1618) target = $region132
        $region131: #{tpu_custom_call.1} parent=71 // pred_region
          %s1622 = ssub.s32 128, 128
          %1623 = vsyncadd %s1609, %s1622
          %s1624 = sadd.s32 %s46, %s45
          %s1625 = smul.addr %s1624, 128
          %s1626 = scalar_lea.hbm %s13, %s1625
          %s1628 = sshll.u32 %s1612, 4
          %s1629 = int_to_ptr.vmem [resolvable:$true] %s1628
          %1631 = dma.vmem_to_hbm [thread:$0]  %s1629, 128, %s1626, %s1609
        $region132: #{tpu_custom_call.1} parent=71 // pred_fallthru
          _
        // Predicated region
        $region133: #{tpu_custom_call.1} parent=71 // pred_check
          %p1632 = pneg %p379
        $region134: #{tpu_custom_call.1} parent=71 // pred_check_branch
          %1634 = sbr.rel (%p1632) target = $region136
        $region135: #{tpu_custom_call.1} parent=71 // pred_region
          %s1636 = ssub.s32 512, 512
          %1637 = vsyncadd %s1614, %s1636
          %s1638 = smul.addr %s45, 4
          %s1639 = sadd.s32 %s46, %s1638
          %s1640 = smul.addr %s1639, 128
          %s1641 = scalar_lea.hbm %s14, %s1640
          %s1642 = sshll.u32 %s1617, 4
          %s1643 = int_to_ptr.vmem [resolvable:$true] %s1642
          %1648 = dma.vmem_to_hbm [thread:$0]  %s1643, 512, %s1641, %s1614, 128, 128, 8
        $region136: #{tpu_custom_call.1} parent=71 // pred_fallthru
          _
      $region72: #{tpu_custom_call.1} parent=5 // pred_fallthru
        _
      %p1649 = scmp.le.s32.totalorder 2, %s36
      // Predicated region
      $region137: #{tpu_custom_call.1} parent=5 // pred_check
        %p1650 = pneg %p1649
      $region138: #{tpu_custom_call.1} parent=5 // pred_check_branch
        %1652 = sbr.rel (%p1650) target = $region140
      $region139: #{tpu_custom_call.1} parent=5 // pred_region
        %s1653 = ssub.s32 %s36, 2
        // Predicated region
        $region141: #{tpu_custom_call.1} parent=139 // pred_check
          %p1654 = pneg %p357
        $region142: #{tpu_custom_call.1} parent=139 // pred_check_branch
          %1656 = sbr.rel (%p1654) target = $region144
        $region143: #{tpu_custom_call.1} parent=139 // pred_region
          %s1657 = sand.u32 %s342, 1
          %s1658 = scalar_lea.sflag [#allocation6], %s1657
          %s1659 = sand.u32 %s342, 1
          %s1660 = smul.addr %s1659, 8
          %s1661 = scalar_lea.vmem [#allocation25], %s1660
          %1662 = dma.done %s1658, 128
        $region144: #{tpu_custom_call.1} parent=139 // pred_fallthru
          _
        // Predicated region
        $region145: #{tpu_custom_call.1} parent=139 // pred_check
          %p1663 = pneg %p385
        $region146: #{tpu_custom_call.1} parent=139 // pred_check_branch
          %1665 = sbr.rel (%p1663) target = $region148
        $region147: #{tpu_custom_call.1} parent=139 // pred_region
          %s1666 = sand.u32 %s370, 1
          %s1667 = scalar_lea.sflag [#allocation27], %s1666
          %s1668 = sand.u32 %s370, 1
          %s1669 = smul.addr %s1668, 32
          %s1670 = scalar_lea.vmem [#allocation26], %s1669
          %1671 = dma.done %s1667, 512
        $region148: #{tpu_custom_call.1} parent=139 // pred_fallthru
          _
      $region140: #{tpu_custom_call.1} parent=5 // pred_fallthru
        _
    $region6: #{tpu_custom_call.1} parent=1 // loop_footer
      %s40 = sadd.s32 1, %s36
    $region7: #{tpu_custom_call.1} parent=1 // loop_footer_branch
      %35 = sbr.rel target = $region3
    $region8: #{tpu_custom_call.1} parent=1 // loop_exit
      _
    %1672 = vsyncpa [#allocation5], 1
    %s1673 = scalar_lea.sflag [#allocation5], 1
    %1674 = vsyncpa %s1673, 1
    %1675 = vsyncpa [#allocation8], 1
    %1676 = vsyncpa [#allocation11], 1
    %1677 = vsyncpa [#allocation14], 1
    %1678 = vsyncpa [#allocation17], 1
    %1679 = vsyncpa [#allocation20], 1
    %1680 = vsyncpa [#allocation23], 1
    %1681 = vsyncpa [#allocation6], 1
    %s1682 = scalar_lea.sflag [#allocation6], 1
    %1683 = vsyncpa %s1682, 1
    %1684 = vsyncpa [#allocation27], 1
    %s1685 = scalar_lea.sflag [#allocation27], 1
    %1686 = vsyncpa %s1685, 1

</llo_original>
